<compile_context>
chip_gen: v7x
topology: tpu7x:2x2x1
jax: 0.10.0
libtpu: 0.0.40
codegen_flags: <defaults>
</compile_context>

<pallas_src>
import jax
import jax.numpy as jnp
import numpy as np
from jax.experimental import pallas as pl
from jax.experimental.pallas import tpu as pltpu

ACTION_EPS = 0.0001

F = 64    # feature_num
L = 8     # history length (time axis)
A1 = 6    # action_dim (bitrate levels)
C = 7     # state channels used by forward()
B = 2     # example batch

SEG = [F, F, F * L, F * L, F * A1, F, F]
OFF = np.concatenate([[0], np.cumsum(SEG)]).tolist()
MERGE = OFF[-1]
assert MERGE == 1664
NHEAD = 3 * F              # 192: bitrate | max_buffer | auxiliary hidden features
OUT_W = 128                # lane-dense packed output slab width
MAX_ROWS_PER_BLOCK = 256   # batch-grid block height (multiple of 8)


# ----------------------------- Pallas kernel --------------------------------
def actor_kernel(x_ref, msplit_ref, bsplit_ref, wfull_ref, bfull_ref, out_ref):
    # splits + ReLU + concat folded into one block-structured bf16 matmul
    merge = jnp.maximum(
        jnp.dot(x_ref[...], msplit_ref[...],
                preferred_element_type=jnp.float32) + bsplit_ref[...],
        0.0)                                                         # [TB, 1664] f32

    # fused (action-linear @ head) matmul -> packed output slab
    #   cols 0:6 bitrate logits | col 6 mu (pre-tanh) | col 7 aux | cols 8: zeros
    heads = jnp.dot(merge.astype(jnp.bfloat16), wfull_ref[...],
                    preferred_element_type=jnp.float32) + bfull_ref[...]   # [TB, 128]

    # lane-masked epilogue: one full-width store, no partial vst.msk writes
    col = jax.lax.broadcasted_iota(jnp.int32, heads.shape, 1)        # [TB, 128]
    is_logit = col < A1
    neg = jnp.float32(-1e30)
    m = jnp.max(jnp.where(is_logit, heads, neg), axis=-1, keepdims=True)
    e = jnp.where(is_logit, jnp.exp(jnp.where(is_logit, heads - m, 0.0)), 0.0)
    a1 = jnp.clip(e / jnp.sum(e, axis=-1, keepdims=True),
                  ACTION_EPS, 1.0 - ACTION_EPS)                      # softmax+clamp
    a2mu = jnp.tanh(heads) * 10.0                                    # max-buffer mu
    out_ref[...] = jnp.where(is_logit, a1,
                             jnp.where(col == A1, a2mu, heads))


# ----------------------------- wrapper ---------------------------------------
def actor_forward(params, x):
    batch = x.shape[0]
    # [B, C, L] -> [B, C*L]: trailing-dim collapse is layout-preserving.
    x_flat = x.reshape(batch, C * L).astype(jnp.bfloat16)

    # Pad rows to a multiple of the block height (>=8 sublanes); grid over batch
    # so large batches shard across both TensorCores on v7x (parallel axis).
    tb = min(MAX_ROWS_PER_BLOCK, ((batch + 7) // 8) * 8)
    pb = ((batch + tb - 1) // tb) * tb
    if pb != batch:
        x_flat = jnp.pad(x_flat, ((0, pb - batch), (0, 0)))
    grid = (pb // tb,)

    weight_bytes = (C * L * MERGE * 2 + MERGE * 4 +        # m_split bf16 + b_split f32
                    MERGE * OUT_W * 2 + OUT_W * 4)         # w_full bf16 + b_full f32
    cost = pl.CostEstimate(
        flops=2 * pb * (C * L) * MERGE + 2 * pb * MERGE * OUT_W,
        transcendentals=pb * (A1 + OUT_W),
        bytes_accessed=weight_bytes + pb * C * L * 2 + pb * OUT_W * 4)

    out = pl.pallas_call(
        actor_kernel,
        out_shape=jax.ShapeDtypeStruct((pb, OUT_W), jnp.float32),
        grid_spec=pltpu.PrefetchScalarGridSpec(
            num_scalar_prefetch=0,
            grid=grid,
            in_specs=[
                pl.BlockSpec((tb, C * L), lambda i: (i, 0)),        # x rows
                pl.BlockSpec((C * L, MERGE), lambda i: (0, 0)),     # m_split (resident)
                pl.BlockSpec((1, MERGE), lambda i: (0, 0)),         # b_split
                pl.BlockSpec((MERGE, OUT_W), lambda i: (0, 0)),     # W_full (resident)
                pl.BlockSpec((1, OUT_W), lambda i: (0, 0)),         # b_full
            ],
            out_specs=pl.BlockSpec((tb, OUT_W), lambda i: (i, 0)),
        ),
        compiler_params=pltpu.CompilerParams(
            dimension_semantics=("parallel",)),
        cost_estimate=cost,
    )(x_flat,
      params["m_split"], params["b_split"],
      params["w_full"], params["b_full"])

    out = out[:batch]
    a1 = out[:, 0:A1]
    a2mu = out[:, A1:A1 + 1]
    a3 = out[:, A1 + 1:A1 + 2]
    a2std = jnp.exp(params["logstd"])        # no dependence on x; plain JAX
    return a1, a2mu, a2std, a3


# ----------------------------- parameters ------------------------------------
def _uniform(key, shape, fan_in):
    bound = 1.0 / np.sqrt(fan_in)
    return jax.random.uniform(key, shape, jnp.float32, -bound, bound)


def _linear(key, fan_in, fan_out):
    kw, kb = jax.random.split(key)
    return _uniform(kw, (fan_in, fan_out), fan_in), _uniform(kb, (1, fan_out), fan_in)


def init_raw_params(key):
    ks = jax.random.split(key, 13)
    raw = {}
    raw["w1"], raw["b1"] = _linear(ks[0], 1, F)
    raw["w2"], raw["b2"] = _linear(ks[1], 1, F)
    for i, name in zip((2, 3, 4), ("3", "4", "5")):        # Conv1d(1, F, k=1)
        kw, kb = jax.random.split(ks[i])
        raw["w" + name] = _uniform(kw, (F,), 1)
        raw["b" + name] = _uniform(kb, (F,), 1)
    raw["w6"], raw["b6"] = _linear(ks[5], 1, F)
    raw["w7"], raw["b7"] = _linear(ks[6], 1, F)
    raw["wbit"], raw["bbit"] = _linear(ks[7], MERGE, F)
    raw["wmax"], raw["bmax"] = _linear(ks[8], MERGE, F)
    raw["waux"], raw["baux"] = _linear(ks[9], MERGE, F)
    raw["wpi"], raw["bpi"] = _linear(ks[10], F, A1)
    raw["wmu"], raw["bmu"] = _linear(ks[11], F, 1)
    raw["wax"], raw["bax"] = _linear(ks[12], F, 1)
    raw["logstd"] = jnp.zeros((1,), jnp.float32)           # nn.Parameter(torch.zeros(1))
    return raw


def _expand_conv(w, b, length):
    # (x @ M + bflat)[b, f*length + t] == w[f] * x[b, t] + b[f]
    # i.e. Conv1d(1, F, k=1) followed by .view(B, -1).
    eye = jnp.eye(length, dtype=jnp.float32)
    M = (eye[:, None, :] * w[None, :, None]).reshape(length, F * length)
    bflat = jnp.broadcast_to(b[:, None], (F, length)).reshape(F * length)
    return M, bflat


def build_kernel_params(raw):
    hp = jax.lax.Precision.HIGHEST

    # ---- one block-structured "split" matrix: x_flat[B,56] @ M_split -> merge[B,1664]
    m_split = jnp.zeros((C * L, MERGE), jnp.float32)
    b_split = jnp.zeros((1, MERGE), jnp.float32)
    # scalar Linear(1,F) splits consume channel c at the last timestep (flat idx c*L + L-1)
    for c, wn, bn, seg in ((0, "w1", "b1", 0), (1, "w2", "b2", 1),
                           (5, "w6", "b6", 5), (6, "w7", "b7", 6)):
        off = OFF[seg]
        m_split = m_split.at[c * L + (L - 1), off:off + F].set(raw[wn][0])
        b_split = b_split.at[0, off:off + F].set(raw[bn][0])
    # Conv1d(1,F,k=1) splits consume the full (or first A1) timesteps of channel c
    for c, wn, bn, seg, length in ((2, "w3", "b3", 2, L), (3, "w4", "b4", 3, L),
                                   (4, "w5", "b5", 4, A1)):
        off = OFF[seg]
        blk, bblk = _expand_conv(raw[wn], raw[bn], length)
        m_split = m_split.at[c * L:c * L + length, off:off + F * length].set(blk)
        b_split = b_split.at[0, off:off + F * length].set(bblk)

    # ---- fused bitrate | max_buffer | auxiliary action linears: [1664, 192]
    w_merged = jnp.concatenate([raw["wbit"], raw["wmax"], raw["waux"]], axis=1)
    b_merged = jnp.concatenate([raw["bbit"], raw["bmax"], raw["baux"]], axis=1)

    # ---- fused block-diagonal heads, zero-padded to a lane-dense [192, 128] slab
    w_head = jnp.zeros((NHEAD, OUT_W), jnp.float32)
    w_head = w_head.at[0:F, 0:A1].set(raw["wpi"])
    w_head = w_head.at[F:2 * F, A1:A1 + 1].set(raw["wmu"])
    w_head = w_head.at[2 * F:3 * F, A1 + 1:A1 + 2].set(raw["wax"])
    b_head = jnp.zeros((1, OUT_W), jnp.float32)
    b_head = b_head.at[0, 0:A1].set(raw["bpi"][0])
    b_head = b_head.at[0, A1:A1 + 1].set(raw["bmu"][0])
    b_head = b_head.at[0, A1 + 1:A1 + 2].set(raw["bax"][0])

    # ---- algebraic fusion of the two back-to-back linear stages (no nonlinearity between)
    w_full = jnp.matmul(w_merged, w_head, precision=hp)              # [1664, 128]
    b_full = jnp.matmul(b_merged, w_head, precision=hp) + b_head     # [1, 128]

    return {"m_split": m_split.astype(jnp.bfloat16),   # bf16 weights, f32 accumulation
            "b_split": b_split,
            "w_full": w_full.astype(jnp.bfloat16),
            "b_full": b_full,
            "logstd": raw["logstd"]}


# ----------------------------- pure-JAX reference ----------------------------
def reference_forward(raw, x):
    hp = jax.lax.Precision.HIGHEST
    mm = lambda a, b: jnp.matmul(a, b, precision=hp)
    relu = lambda v: jnp.maximum(v, 0.0)

    def conv1(xc, w, b):  # Conv1d(1, F, k=1) then .view(B, -1)
        y = xc[:, None, :] * w[None, :, None] + b[None, :, None]   # [B, F, T]
        return y.reshape(xc.shape[0], -1)

    s1 = relu(mm(x[:, 0:1, -1], raw["w1"]) + raw["b1"])
    s2 = relu(mm(x[:, 1:2, -1], raw["w2"]) + raw["b2"])
    s3 = relu(conv1(x[:, 2, :], raw["w3"], raw["b3"]))
    s4 = relu(conv1(x[:, 3, :], raw["w4"], raw["b4"]))
    s5 = relu(conv1(x[:, 4, :A1], raw["w5"], raw["b5"]))
    s6 = relu(mm(x[:, 5:6, -1], raw["w6"]) + raw["b6"])
    s7 = relu(mm(x[:, 6:7, -1], raw["w7"]) + raw["b7"])
    merge = jnp.concatenate([s1, s2, s3, s4, s5, s6, s7], axis=1)

    h1 = mm(merge, raw["wbit"]) + raw["bbit"]
    a1 = jax.nn.softmax(mm(h1, raw["wpi"]) + raw["bpi"], axis=-1)
    a1 = jnp.clip(a1, ACTION_EPS, 1.0 - ACTION_EPS)

    h2 = mm(merge, raw["wmax"]) + raw["bmax"]
    a2mu = jnp.tanh(mm(h2, raw["wmu"]) + raw["bmu"]) * 10.0
    a2std = jnp.exp(raw["logstd"])

    h3 = mm(merge, raw["waux"]) + raw["baux"]
    a3 = mm(h3, raw["wax"]) + raw["bax"]
    return a1, a2mu, a2std, a3


# ----------------------------- main -------------------------------------------
if __name__ == "__main__":
    key = jax.random.PRNGKey(0)
    kx, kp = jax.random.split(key)
    x = jax.random.normal(kx, (B, C, L), dtype=jnp.float32)

    raw = init_raw_params(kp)
    params = build_kernel_params(raw)   # one-time weight fusion (wrapper side)

    outs = jax.jit(actor_forward)(params, x)
    outs = jax.block_until_ready(outs)

    refs = reference_forward(raw, x)
    # bf16 fused weights with f32 accumulation: relaxed tolerance vs. f32 reference.
    for o, r in zip(outs, refs):
        np.testing.assert_allclose(np.asarray(o), np.asarray(r), rtol=2e-2, atol=2e-2)

    print("KERNEL_OK")
</pallas_src>

<mosaic_0001>
module attributes {stable_mosaic.version = 11 : i64} {
  func.func @actor_kernel(%arg0: i32, %arg1: memref<8x56xbf16, #tpu.memory_space<vmem>>, %arg2: memref<56x1664xbf16, #tpu.memory_space<vmem>>, %arg3: memref<1x1664xf32, #tpu.memory_space<vmem>>, %arg4: memref<1664x128xbf16, #tpu.memory_space<vmem>>, %arg5: memref<1x128xf32, #tpu.memory_space<vmem>>, %arg6: memref<8x128xf32, #tpu.memory_space<vmem>>) attributes {dimension_semantics = [#tpu.dimension_semantics<parallel>], iteration_bounds = array<i64: 1>, scalar_prefetch = 0 : i64, scratch_operands = 0 : i64, tpu.core_type = #tpu.core_type<tc>, window_params = [{transform_indices = @transform_0, window_bounds = array<i64: 8, 56>}, {pipeline_mode = #tpu.pipeline_mode<synchronous>, transform_indices = @transform_1, window_bounds = array<i64: 56, 1664>}, {pipeline_mode = #tpu.pipeline_mode<synchronous>, transform_indices = @transform_2, window_bounds = array<i64: 1, 1664>}, {pipeline_mode = #tpu.pipeline_mode<synchronous>, transform_indices = @transform_3, window_bounds = array<i64: 1664, 128>}, {pipeline_mode = #tpu.pipeline_mode<synchronous>, transform_indices = @transform_4, window_bounds = array<i64: 1, 128>}, {transform_indices = @transform_5, window_bounds = array<i64: 8, 128>}]} {
    %c0 = arith.constant 0 : index
    %c0_0 = arith.constant 0 : index
    %0 = vector.load %arg1[%c0, %c0_0] : memref<8x56xbf16, #tpu.memory_space<vmem>>, vector<8x56xbf16>
    %c0_1 = arith.constant 0 : index
    %c0_2 = arith.constant 0 : index
    %1 = vector.load %arg2[%c0_1, %c0_2] : memref<56x1664xbf16, #tpu.memory_space<vmem>>, vector<56x1664xbf16>
    %cst = arith.constant dense<0.000000e+00> : vector<8x1664xf32>
    %2 = tpu.matmul %0, %1, %cst {dimension_numbers = #tpu.dot_dimension_numbers<[1], [0], [0], [1], [0, 0, 1, 1], [], []>} : vector<8x56xbf16>, vector<56x1664xbf16>, vector<8x1664xf32> -> vector<8x1664xf32>
    %c0_3 = arith.constant 0 : index
    %c0_4 = arith.constant 0 : index
    %3 = vector.load %arg3[%c0_3, %c0_4] : memref<1x1664xf32, #tpu.memory_space<vmem>>, vector<1x1664xf32>
    %4 = vector.broadcast %3 : vector<1x1664xf32> to vector<8x1664xf32>
    %5 = arith.addf %2, %4 : vector<8x1664xf32>
    %cst_5 = arith.constant 0.000000e+00 : f32
    %6 = vector.broadcast %cst_5 : f32 to vector<8x1664xf32>
    %7 = arith.maximumf %5, %6 : vector<8x1664xf32>
    %8 = arith.truncf %7 : vector<8x1664xf32> to vector<8x1664xbf16>
    %c0_6 = arith.constant 0 : index
    %c0_7 = arith.constant 0 : index
    %9 = vector.load %arg4[%c0_6, %c0_7] : memref<1664x128xbf16, #tpu.memory_space<vmem>>, vector<1664x128xbf16>
    %cst_8 = arith.constant dense<0.000000e+00> : vector<8x128xf32>
    %10 = tpu.matmul %8, %9, %cst_8 {dimension_numbers = #tpu.dot_dimension_numbers<[1], [0], [0], [1], [0, 0, 1, 1], [], []>} : vector<8x1664xbf16>, vector<1664x128xbf16>, vector<8x128xf32> -> vector<8x128xf32>
    %c0_9 = arith.constant 0 : index
    %c0_10 = arith.constant 0 : index
    %11 = vector.load %arg5[%c0_9, %c0_10] : memref<1x128xf32, #tpu.memory_space<vmem>>, vector<1x128xf32>
    %12 = vector.broadcast %11 : vector<1x128xf32> to vector<8x128xf32>
    %13 = arith.addf %10, %12 : vector<8x128xf32>
    %14 = tpu.iota {dimensions = array<i32: 1>} : vector<8x128xi32>
    %c6_i32 = arith.constant 6 : i32
    %15 = vector.broadcast %c6_i32 : i32 to vector<8x128xi32>
    %16 = arith.cmpi slt, %14, %15 : vector<8x128xi32>
    %cst_11 = arith.constant -1.000000e+30 : f32
    %17 = vector.broadcast %cst_11 : f32 to vector<8x128xf32>
    %18 = arith.select %16, %13, %17 : vector<8x128xi1>, vector<8x128xf32>
    %cst_12 = arith.constant dense<0xFF800000> : vector<8xf32>
    %19 = vector.multi_reduction <maximumf>, %18, %cst_12 [1] : vector<8x128xf32> to vector<8xf32>
    %20 = vector.shape_cast %19 : vector<8xf32> to vector<8x1xf32>
    %21 = vector.broadcast %20 : vector<8x1xf32> to vector<8x128xf32>
    %22 = arith.subf %13, %21 : vector<8x128xf32>
    %cst_13 = arith.constant 0.000000e+00 : f32
    %23 = vector.broadcast %cst_13 : f32 to vector<8x128xf32>
    %24 = arith.select %16, %22, %23 : vector<8x128xi1>, vector<8x128xf32>
    %25 = math.exp %24 : vector<8x128xf32>
    %cst_14 = arith.constant 0.000000e+00 : f32
    %26 = vector.broadcast %cst_14 : f32 to vector<8x128xf32>
    %27 = arith.select %16, %25, %26 : vector<8x128xi1>, vector<8x128xf32>
    %cst_15 = arith.constant dense<0.000000e+00> : vector<8xf32>
    %28 = vector.multi_reduction <add>, %27, %cst_15 [1] : vector<8x128xf32> to vector<8xf32>
    %29 = vector.shape_cast %28 : vector<8xf32> to vector<8x1xf32>
    %30 = vector.broadcast %29 : vector<8x1xf32> to vector<8x128xf32>
    %31 = arith.divf %27, %30 : vector<8x128xf32>
    %cst_16 = arith.constant 9.99999974E-5 : f32
    %cst_17 = arith.constant 0.999899983 : f32
    %32 = vector.broadcast %cst_16 : f32 to vector<8x128xf32>
    %33 = arith.maximumf %32, %31 : vector<8x128xf32>
    %34 = vector.broadcast %cst_17 : f32 to vector<8x128xf32>
    %35 = arith.minimumf %34, %33 : vector<8x128xf32>
    %36 = math.tanh %13 : vector<8x128xf32>
    %cst_18 = arith.constant 1.000000e+01 : f32
    %37 = vector.broadcast %cst_18 : f32 to vector<8x128xf32>
    %38 = arith.mulf %36, %37 : vector<8x128xf32>
    %c6_i32_19 = arith.constant 6 : i32
    %39 = vector.broadcast %c6_i32_19 : i32 to vector<8x128xi32>
    %40 = arith.cmpi eq, %14, %39 : vector<8x128xi32>
    %41 = arith.select %40, %38, %13 : vector<8x128xi1>, vector<8x128xf32>
    %42 = arith.select %16, %35, %41 : vector<8x128xi1>, vector<8x128xf32>
    %c0_20 = arith.constant 0 : index
    %c0_21 = arith.constant 0 : index
    %43 = vector.load %arg6[%c0_20, %c0_21] : memref<8x128xf32, #tpu.memory_space<vmem>>, vector<8x128xf32>
    tpu.vector_store %arg6[%c0_20, %c0_21], %42 {strides = array<i32>} : memref<8x128xf32, #tpu.memory_space<vmem>>, vector<8x128xf32>,
    return
  }
  func.func @transform_0(%arg0: i32) -> (i32, i32) {
    %c0_i32 = arith.constant 0 : i32
    %c0_i32_0 = arith.constant 0 : i32
    return %arg0, %c0_i32 : i32, i32
  }
  func.func @transform_1(%arg0: i32) -> (i32, i32) {
    %c0_i32 = arith.constant 0 : i32
    %c0_i32_0 = arith.constant 0 : i32
    %c0_i32_1 = arith.constant 0 : i32
    return %c0_i32, %c0_i32_0 : i32, i32
  }
  func.func @transform_2(%arg0: i32) -> (i32, i32) {
    %c0_i32 = arith.constant 0 : i32
    %c0_i32_0 = arith.constant 0 : i32
    %c0_i32_1 = arith.constant 0 : i32
    return %c0_i32, %c0_i32_0 : i32, i32
  }
  func.func @transform_3(%arg0: i32) -> (i32, i32) {
    %c0_i32 = arith.constant 0 : i32
    %c0_i32_0 = arith.constant 0 : i32
    %c0_i32_1 = arith.constant 0 : i32
    return %c0_i32, %c0_i32_0 : i32, i32
  }
  func.func @transform_4(%arg0: i32) -> (i32, i32) {
    %c0_i32 = arith.constant 0 : i32
    %c0_i32_0 = arith.constant 0 : i32
    %c0_i32_1 = arith.constant 0 : i32
    return %c0_i32, %c0_i32_0 : i32, i32
  }
  func.func @transform_5(%arg0: i32) -> (i32, i32) {
    %c0_i32 = arith.constant 0 : i32
    %c0_i32_0 = arith.constant 0 : i32
    return %arg0, %c0_i32 : i32, i32
  }
}

</mosaic_0001>

<llo_original>
// kernel: actor_forward.1
$region0: #{actor_forward.1}
  #allocation0 [shape = 'u32[]', space=smem, size = 0x4, offset = 0x4, fixed_abs, tag = 'smem constant byte address 0x4 - core index']
  #allocation1 [shape = 'u32[144,128]{1,0:T(1,128)}', space=vmem, size = 0x12000, scoped, tag = 'internal scratch']
  %s0 = inlined_call_operand.vmem [shape: bf16[8,56], index: 0, kind: input, shape index: {}]
  %s1 = inlined_call_operand.hbm [shape: bf16[56,1664], index: 1, kind: input, shape index: {}]
  %s2 = inlined_call_operand.vmem [shape: f32[1,1664], index: 2, kind: input, shape index: {}]
  %s3 = inlined_call_operand.hbm [shape: bf16[1664,128], index: 3, kind: input, shape index: {}]
  %s4 = inlined_call_operand.vmem [shape: f32[1,128], index: 4, kind: input, shape index: {}]
  %s5 = inlined_call_operand.vmem [shape: f32[8,128], index: 5, kind: output, shape index: {}]
  %s6 = sld [smem:[#allocation0]]
  $region38: #{actor_forward.1} parent=0
    _
  %s8 = ssub.s32 1, %s6
  %s9 = scalar_select 0, %s8, %s6
  $region1: #{actor_forward.1} parent=0
    #allocation2 [shape = 'u8[186368]{0}', space=vmem, size = 0x2d800, scoped, tag = 'input window, operand 1, single buffered']
    #allocation3 [shape = 's32[1]{0}', space=sflag, size = 0x4, scoped, tag = 'scoped memory for actor_forward.1']
    #allocation4 [shape = 'u8[425984]{0}', space=vmem, size = 0x68000, scoped, tag = 'input window, operand 3, single buffered']
    #allocation5 [shape = 's32[1]{0}', space=sflag, size = 0x4, scoped, tag = 'scoped memory for actor_forward.1']
    %10 = vsyncpa [#allocation3], 0
    %11 = vsyncpa [#allocation5], 0
    // Predicated region
    $region2: #{actor_forward.1} parent=1 // pred_check
      _
    $region3: #{actor_forward.1} parent=1 // pred_check_branch
      %13 = sbr.rel (0) target = $region5
    $region4: #{actor_forward.1} parent=1 // pred_region
      _
    $region5: #{actor_forward.1} parent=1 // pred_fallthru
      _
    // Predicated region
    $region6: #{actor_forward.1} parent=1 // pred_check
      _
    $region7: #{actor_forward.1} parent=1 // pred_check_branch
      %15 = sbr.rel (0) target = $region9
    $region8: #{actor_forward.1} parent=1 // pred_region
      %s17 = ssub.s32 5824, 5824
      %18 = vsyncadd [#allocation3], %s17
      %s19 = sshll.u32 [#allocation2], 4
      %s20 = int_to_ptr.vmem [resolvable:$true] %s19
      %25 = dma.hbm_to_vmem [thread:$0]  %s1, 5824, %s20, [#allocation3], 832, 832, 52
    $region9: #{actor_forward.1} parent=1 // pred_fallthru
      _
    // Predicated region
    $region10: #{actor_forward.1} parent=1 // pred_check
      _
    $region11: #{actor_forward.1} parent=1 // pred_check_branch
      %27 = sbr.rel (0) target = $region13
    $region12: #{actor_forward.1} parent=1 // pred_region
      _
    $region13: #{actor_forward.1} parent=1 // pred_fallthru
      _
    // Predicated region
    $region14: #{actor_forward.1} parent=1 // pred_check
      _
    $region15: #{actor_forward.1} parent=1 // pred_check_branch
      %29 = sbr.rel (0) target = $region17
    $region16: #{actor_forward.1} parent=1 // pred_region
      %s31 = ssub.s32 13312, 13312
      %32 = vsyncadd [#allocation5], %s31
      %s33 = sshll.u32 [#allocation4], 4
      %s34 = int_to_ptr.vmem [resolvable:$true] %s33
      %39 = dma.hbm_to_vmem [thread:$0]  %s3, 13312, %s34, [#allocation5], 64, 64, 4
    $region17: #{actor_forward.1} parent=1 // pred_fallthru
      _
    // Predicated region
    $region18: #{actor_forward.1} parent=1 // pred_check
      _
    $region19: #{actor_forward.1} parent=1 // pred_check_branch
      %41 = sbr.rel (0) target = $region21
    $region20: #{actor_forward.1} parent=1 // pred_region
      _
    $region21: #{actor_forward.1} parent=1 // pred_fallthru
      _
    // Predicated region
    $region22: #{actor_forward.1} parent=1 // pred_check
      _
    $region23: #{actor_forward.1} parent=1 // pred_check_branch
      %43 = sbr.rel (0) target = $region25
    $region24: #{actor_forward.1} parent=1 // pred_region
      %44 = dma.done [#allocation3], 5824
    $region25: #{actor_forward.1} parent=1 // pred_fallthru
      _
    // Predicated region
    $region26: #{actor_forward.1} parent=1 // pred_check
      _
    $region27: #{actor_forward.1} parent=1 // pred_check_branch
      %46 = sbr.rel (0) target = $region29
    $region28: #{actor_forward.1} parent=1 // pred_region
      %47 = dma.done [#allocation5], 13312
    $region29: #{actor_forward.1} parent=1 // pred_fallthru
      _
    %v49 = vld [vmem:[%s0] sm:$0xf]
    %v50 = vld [vmem:[#allocation2] sm:$0xff]
    %v51 = vld [vmem:[#allocation2 + $0x8] sm:$0xff]
    %v52 = vld [vmem:[#allocation2 + $0x10] sm:$0xff]
    %v53 = vld [vmem:[#allocation2 + $0x18] sm:$0xff]
    %v54 = vld [vmem:[#allocation2 + $0x20] sm:$0xff]
    %v55 = vld [vmem:[#allocation2 + $0x28] sm:$0xff]
    %v56 = vld [vmem:[#allocation2 + $0x30] sm:$0xf]
    %v57 = vld [vmem:[#allocation2 + $0x34] sm:$0xff]
    %v58 = vld [vmem:[#allocation2 + $0x3c] sm:$0xff]
    %v59 = vld [vmem:[#allocation2 + $0x44] sm:$0xff]
    %v60 = vld [vmem:[#allocation2 + $0x4c] sm:$0xff]
    %v61 = vld [vmem:[#allocation2 + $0x54] sm:$0xff]
    %v62 = vld [vmem:[#allocation2 + $0x5c] sm:$0xff]
    %v63 = vld [vmem:[#allocation2 + $0x64] sm:$0xf]
    %v64 = vld [vmem:[#allocation2 + $0x68] sm:$0xff]
    %v65 = vld [vmem:[#allocation2 + $0x70] sm:$0xff]
    %v66 = vld [vmem:[#allocation2 + $0x78] sm:$0xff]
    %v67 = vld [vmem:[#allocation2 + $0x80] sm:$0xff]
    %v68 = vld [vmem:[#allocation2 + $0x88] sm:$0xff]
    %v69 = vld [vmem:[#allocation2 + $0x90] sm:$0xff]
    %v70 = vld [vmem:[#allocation2 + $0x98] sm:$0xf]
    %v71 = vld [vmem:[#allocation2 + $0x9c] sm:$0xff]
    %v72 = vld [vmem:[#allocation2 + $0xa4] sm:$0xff]
    %v73 = vld [vmem:[#allocation2 + $0xac] sm:$0xff]
    %v74 = vld [vmem:[#allocation2 + $0xb4] sm:$0xff]
    %v75 = vld [vmem:[#allocation2 + $0xbc] sm:$0xff]
    %v76 = vld [vmem:[#allocation2 + $0xc4] sm:$0xff]
    %v77 = vld [vmem:[#allocation2 + $0xcc] sm:$0xf]
    %v78 = vld [vmem:[#allocation2 + $0xd0] sm:$0xff]
    %v79 = vld [vmem:[#allocation2 + $0xd8] sm:$0xff]
    %v80 = vld [vmem:[#allocation2 + $0xe0] sm:$0xff]
    %v81 = vld [vmem:[#allocation2 + $0xe8] sm:$0xff]
    %v82 = vld [vmem:[#allocation2 + $0xf0] sm:$0xff]
    %v83 = vld [vmem:[#allocation2 + $0xf8] sm:$0xff]
    %v84 = vld [vmem:[#allocation2 + $0x100] sm:$0xf]
    %v85 = vld [vmem:[#allocation2 + $0x104] sm:$0xff]
    %v86 = vld [vmem:[#allocation2 + $0x10c] sm:$0xff]
    %v87 = vld [vmem:[#allocation2 + $0x114] sm:$0xff]
    %v88 = vld [vmem:[#allocation2 + $0x11c] sm:$0xff]
    %v89 = vld [vmem:[#allocation2 + $0x124] sm:$0xff]
    %v90 = vld [vmem:[#allocation2 + $0x12c] sm:$0xff]
    %v91 = vld [vmem:[#allocation2 + $0x134] sm:$0xf]
    %v92 = vld [vmem:[#allocation2 + $0x138] sm:$0xff]
    %v93 = vld [vmem:[#allocation2 + $0x140] sm:$0xff]
    %v94 = vld [vmem:[#allocation2 + $0x148] sm:$0xff]
    %v95 = vld [vmem:[#allocation2 + $0x150] sm:$0xff]
    %v96 = vld [vmem:[#allocation2 + $0x158] sm:$0xff]
    %v97 = vld [vmem:[#allocation2 + $0x160] sm:$0xff]
    %v98 = vld [vmem:[#allocation2 + $0x168] sm:$0xf]
    %v99 = vld [vmem:[%s2] sm:$0xff]
    %v100 = vld [vmem:[%s2 + $0x8] sm:$0x1f]
    %v103 = vlaneseq
    %v104 = vshrl.u32 %v103, 7
    %v105 = vsub.s32 0, %v104
    %v106 = vrot.slane %v99, %v105
    %v107 = vlaneseq
    %v108 = vshrl.u32 %v107, 7
    %v109 = vsub.s32 1, %v108
    %v110 = vrot.slane %v99, %v109
    %v111 = vlaneseq
    %v112 = vshrl.u32 %v111, 7
    %v113 = vsub.s32 2, %v112
    %v114 = vrot.slane %v99, %v113
    %v115 = vlaneseq
    %v116 = vshrl.u32 %v115, 7
    %v117 = vsub.s32 3, %v116
    %v118 = vrot.slane %v99, %v117
    %v119 = vlaneseq
    %v120 = vshrl.u32 %v119, 7
    %v121 = vsub.s32 4, %v120
    %v122 = vrot.slane %v99, %v121
    %v123 = vlaneseq
    %v124 = vshrl.u32 %v123, 7
    %v125 = vsub.s32 5, %v124
    %v126 = vrot.slane %v99, %v125
    %v127 = vlaneseq
    %v128 = vshrl.u32 %v127, 7
    %v129 = vsub.s32 6, %v128
    %v130 = vrot.slane %v99, %v129
    %v131 = vlaneseq
    %v132 = vshrl.u32 %v131, 7
    %v133 = vsub.s32 7, %v132
    %v134 = vrot.slane %v99, %v133
    %v135 = vlaneseq
    %v136 = vshrl.u32 %v135, 7
    %v137 = vsub.s32 0, %v136
    %v138 = vrot.slane %v100, %v137
    %v139 = vlaneseq
    %v140 = vshrl.u32 %v139, 7
    %v141 = vsub.s32 1, %v140
    %v142 = vrot.slane %v100, %v141
    %v143 = vlaneseq
    %v144 = vshrl.u32 %v143, 7
    %v145 = vsub.s32 2, %v144
    %v146 = vrot.slane %v100, %v145
    %v147 = vlaneseq
    %v148 = vshrl.u32 %v147, 7
    %v149 = vsub.s32 3, %v148
    %v150 = vrot.slane %v100, %v149
    %v151 = vlaneseq
    %v152 = vshrl.u32 %v151, 7
    %v153 = vsub.s32 4, %v152
    %v154 = vrot.slane %v100, %v153
    %v217 = vunpack.c.l.b16 %v50
    %v218 = vunpack.c.h.b16 %v50
    %v219 = vunpack.c.l.b16 %v51
    %v220 = vunpack.c.h.b16 %v51
    %v221 = vunpack.c.l.b16 %v52
    %v222 = vunpack.c.h.b16 %v52
    %v223 = vunpack.c.l.b16 %v53
    %v224 = vunpack.c.h.b16 %v53
    %v225 = vunpack.c.l.b16 %v54
    %v226 = vunpack.c.h.b16 %v54
    %v227 = vunpack.c.l.b16 %v55
    %v228 = vunpack.c.h.b16 %v55
    %v229 = vunpack.c.l.b16 %v56
    %v230 = vunpack.c.l.b16 %v57
    %v231 = vunpack.c.h.b16 %v57
    %v232 = vunpack.c.l.b16 %v58
    %v233 = vunpack.c.h.b16 %v58
    %v234 = vunpack.c.l.b16 %v59
    %v235 = vunpack.c.h.b16 %v59
    %v236 = vunpack.c.l.b16 %v60
    %v237 = vunpack.c.h.b16 %v60
    %v238 = vunpack.c.l.b16 %v61
    %v239 = vunpack.c.h.b16 %v61
    %v240 = vunpack.c.l.b16 %v62
    %v241 = vunpack.c.h.b16 %v62
    %v242 = vunpack.c.l.b16 %v63
    %v243 = vunpack.c.l.b16 %v64
    %v244 = vunpack.c.h.b16 %v64
    %v245 = vunpack.c.l.b16 %v65
    %v246 = vunpack.c.h.b16 %v65
    %v247 = vunpack.c.l.b16 %v66
    %v248 = vunpack.c.h.b16 %v66
    %v249 = vunpack.c.l.b16 %v67
    %v250 = vunpack.c.h.b16 %v67
    %v251 = vunpack.c.l.b16 %v68
    %v252 = vunpack.c.h.b16 %v68
    %v253 = vunpack.c.l.b16 %v69
    %v254 = vunpack.c.h.b16 %v69
    %v255 = vunpack.c.l.b16 %v70
    %v256 = vunpack.c.l.b16 %v71
    %v257 = vunpack.c.h.b16 %v71
    %v258 = vunpack.c.l.b16 %v72
    %v259 = vunpack.c.h.b16 %v72
    %v260 = vunpack.c.l.b16 %v73
    %v261 = vunpack.c.h.b16 %v73
    %v262 = vunpack.c.l.b16 %v74
    %v263 = vunpack.c.h.b16 %v74
    %v264 = vunpack.c.l.b16 %v75
    %v265 = vunpack.c.h.b16 %v75
    %v266 = vunpack.c.l.b16 %v76
    %v267 = vunpack.c.h.b16 %v76
    %v268 = vunpack.c.l.b16 %v77
    %v269 = vunpack.c.l.b16 %v78
    %v270 = vunpack.c.h.b16 %v78
    %v271 = vunpack.c.l.b16 %v79
    %v272 = vunpack.c.h.b16 %v79
    %v273 = vunpack.c.l.b16 %v80
    %v274 = vunpack.c.h.b16 %v80
    %v275 = vunpack.c.l.b16 %v81
    %v276 = vunpack.c.h.b16 %v81
    %v277 = vunpack.c.l.b16 %v82
    %v278 = vunpack.c.h.b16 %v82
    %v279 = vunpack.c.l.b16 %v83
    %v280 = vunpack.c.h.b16 %v83
    %v281 = vunpack.c.l.b16 %v84
    %v282 = vunpack.c.l.b16 %v85
    %v283 = vunpack.c.h.b16 %v85
    %v284 = vunpack.c.l.b16 %v86
    %v285 = vunpack.c.h.b16 %v86
    %v286 = vunpack.c.l.b16 %v87
    %v287 = vunpack.c.h.b16 %v87
    %v288 = vunpack.c.l.b16 %v88
    %v289 = vunpack.c.h.b16 %v88
    %v290 = vunpack.c.l.b16 %v89
    %v291 = vunpack.c.h.b16 %v89
    %v292 = vunpack.c.l.b16 %v90
    %v293 = vunpack.c.h.b16 %v90
    %v294 = vunpack.c.l.b16 %v91
    %v295 = vunpack.c.l.b16 %v92
    %v296 = vunpack.c.h.b16 %v92
    %v297 = vunpack.c.l.b16 %v93
    %v298 = vunpack.c.h.b16 %v93
    %v299 = vunpack.c.l.b16 %v94
    %v300 = vunpack.c.h.b16 %v94
    %v301 = vunpack.c.l.b16 %v95
    %v302 = vunpack.c.h.b16 %v95
    %v303 = vunpack.c.l.b16 %v96
    %v304 = vunpack.c.h.b16 %v96
    %v305 = vunpack.c.l.b16 %v97
    %v306 = vunpack.c.h.b16 %v97
    %v307 = vunpack.c.l.b16 %v98
    %v308 = vpack.c.b16 %v230, %v217
    %v309 = vpack.c.b16 %v231, %v218
    %v310 = vpack.c.b16 %v232, %v219
    %v311 = vpack.c.b16 %v233, %v220
    %v312 = vpack.c.b16 %v234, %v221
    %v313 = vpack.c.b16 %v235, %v222
    %v314 = vpack.c.b16 %v236, %v223
    %v315 = vpack.c.b16 %v237, %v224
    %v316 = vpack.c.b16 %v238, %v225
    %v317 = vpack.c.b16 %v239, %v226
    %v318 = vpack.c.b16 %v240, %v227
    %v319 = vpack.c.b16 %v241, %v228
    %v320 = vpack.c.b16 %v242, %v229
    %v321 = vpack.c.b16 %v256, %v243
    %v322 = vpack.c.b16 %v257, %v244
    %v323 = vpack.c.b16 %v258, %v245
    %v324 = vpack.c.b16 %v259, %v246
    %v325 = vpack.c.b16 %v260, %v247
    %v326 = vpack.c.b16 %v261, %v248
    %v327 = vpack.c.b16 %v262, %v249
    %v328 = vpack.c.b16 %v263, %v250
    %v329 = vpack.c.b16 %v264, %v251
    %v330 = vpack.c.b16 %v265, %v252
    %v331 = vpack.c.b16 %v266, %v253
    %v332 = vpack.c.b16 %v267, %v254
    %v333 = vpack.c.b16 %v268, %v255
    %v334 = vpack.c.b16 %v282, %v269
    %v335 = vpack.c.b16 %v283, %v270
    %v336 = vpack.c.b16 %v284, %v271
    %v337 = vpack.c.b16 %v285, %v272
    %v338 = vpack.c.b16 %v286, %v273
    %v339 = vpack.c.b16 %v287, %v274
    %v340 = vpack.c.b16 %v288, %v275
    %v341 = vpack.c.b16 %v289, %v276
    %v342 = vpack.c.b16 %v290, %v277
    %v343 = vpack.c.b16 %v291, %v278
    %v344 = vpack.c.b16 %v292, %v279
    %v345 = vpack.c.b16 %v293, %v280
    %v346 = vpack.c.b16 %v294, %v281
    %v347 = vpack.c.b16 %v295, %v295
    %v348 = vpack.c.b16 %v296, %v296
    %v349 = vpack.c.b16 %v297, %v297
    %v350 = vpack.c.b16 %v298, %v298
    %v351 = vpack.c.b16 %v299, %v299
    %v352 = vpack.c.b16 %v300, %v300
    %v353 = vpack.c.b16 %v301, %v301
    %v354 = vpack.c.b16 %v302, %v302
    %v355 = vpack.c.b16 %v303, %v303
    %v356 = vpack.c.b16 %v304, %v304
    %v357 = vpack.c.b16 %v305, %v305
    %v358 = vpack.c.b16 %v306, %v306
    %v359 = vpack.c.b16 %v307, %v307
    %vm399 = vcmask 457728
    %v401 = vsel %vm399, %v49, 0
    %vm403 = vcmask 1043456
    %v405 = vsel %vm403, %v347, 0
    %v408 = vsel %vm403, %v348, 0
    %v411 = vsel %vm403, %v349, 0
    %v414 = vsel %vm403, %v350, 0
    %v417 = vsel %vm403, %v351, 0
    %v420 = vsel %vm403, %v352, 0
    %v423 = vsel %vm403, %v353, 0
    %v426 = vsel %vm403, %v354, 0
    %v429 = vsel %vm403, %v355, 0
    %v432 = vsel %vm403, %v356, 0
    %v435 = vsel %vm403, %v357, 0
    %v438 = vsel %vm403, %v358, 0
    %v441 = vsel %vm403, %v359, 0
    %443 = vmatprep.subr.bf16.mxu0 %v309
    %444 = vmatpush1.bf16.msra.mxu0 %v308
    %445 = vmatprep.subr.bf16.mxu0 %v322
    %446 = vmatpush1.bf16.msra.mxu0 %v321
    %447 = vmatprep.subr.bf16.mxu0 %v335
    %448 = vmatpush1.bf16.msra.mxu0 %v334
    %449 = vmatprep.subr.bf16.mxu0 %v408
    %450 = vmatpush1.bf16.msra.mxu0 %v405
    %451 = vmatprep.subr.bf16.mxu0 0
    %452 = vmatpush1.bf16.msra.mxu0 0
    %453 = vmatprep.subr.bf16.mxu0 0
    %454 = vmatpush1.bf16.msra.mxu0 0
    %455 = vmatprep.subr.bf16.mxu0 0
    %456 = vmatpush1.bf16.msra.mxu0 0
    %457 = vmatprep.subr.bf16.mxu0 0
    %458 = vmatpush1.bf16.msra.mxu0 0
    %459 = vmatprep.subr.bf16.mxu0 0
    %460 = vmatpush1.bf16.msra.mxu0 0
    %461 = vmatprep.subr.bf16.mxu0 0
    %462 = vmatpush1.bf16.msra.mxu0 0
    %463 = vmatprep.subr.bf16.mxu0 0
    %464 = vmatpush1.bf16.msra.mxu0 0
    %465 = vmatprep.subr.bf16.mxu0 0
    %466 = vmatpush1.bf16.msra.mxu0 0
    %467 = vmatprep.subr.bf16.mxu0 0
    %468 = vmatpush1.bf16.msra.mxu0 0
    %469 = vmatprep.subr.bf16.mxu0 0
    %470 = vmatpush1.bf16.msra.mxu0 0
    %471 = vmatprep.subr.bf16.mxu0 0
    %472 = vmatpush1.bf16.msra.mxu0 0
    %473 = vmatprep.subr.bf16.mxu0 0
    %474 = vmatpush1.bf16.msra.mxu0 0
    %475 = vmatprep.mubr.bf16.mxu0 0
    %476 = vmatmul.mubr.bf16.gmra.mrb[0].mxu0 %v401
    %v477 = vpop.f32.mrb[0].mxu0
    %v478 = vadd.f32 %v106, %v477
    %v479 = vpop.f32.mrb[0].mxu0
    %v480 = vadd.f32 %v110, %v479
    %v481 = vpop.f32.mrb[0].mxu0
    %v482 = vpop.f32.mrb[0].mxu0
    %483 = vdwg.mxu0
    %484 = vmatprep.subr.bf16.mxu0 %v311
    %485 = vmatpush1.bf16.msra.mxu0 %v310
    %486 = vmatprep.subr.bf16.mxu0 %v324
    %487 = vmatpush1.bf16.msra.mxu0 %v323
    %488 = vmatprep.subr.bf16.mxu0 %v337
    %489 = vmatpush1.bf16.msra.mxu0 %v336
    %490 = vmatprep.subr.bf16.mxu0 %v414
    %491 = vmatpush1.bf16.msra.mxu0 %v411
    %492 = vmatprep.subr.bf16.mxu0 0
    %493 = vmatpush1.bf16.msra.mxu0 0
    %494 = vmatprep.subr.bf16.mxu0 0
    %495 = vmatpush1.bf16.msra.mxu0 0
    %496 = vmatprep.subr.bf16.mxu0 0
    %497 = vmatpush1.bf16.msra.mxu0 0
    %498 = vmatprep.subr.bf16.mxu0 0
    %499 = vmatpush1.bf16.msra.mxu0 0
    %500 = vmatprep.subr.bf16.mxu0 0
    %501 = vmatpush1.bf16.msra.mxu0 0
    %502 = vmatprep.subr.bf16.mxu0 0
    %503 = vmatpush1.bf16.msra.mxu0 0
    %504 = vmatprep.subr.bf16.mxu0 0
    %505 = vmatpush1.bf16.msra.mxu0 0
    %506 = vmatprep.subr.bf16.mxu0 0
    %507 = vmatpush1.bf16.msra.mxu0 0
    %508 = vmatprep.subr.bf16.mxu0 0
    %509 = vmatpush1.bf16.msra.mxu0 0
    %510 = vmatprep.subr.bf16.mxu0 0
    %511 = vmatpush1.bf16.msra.mxu0 0
    %512 = vmatprep.subr.bf16.mxu0 0
    %513 = vmatpush1.bf16.msra.mxu0 0
    %514 = vmatprep.subr.bf16.mxu0 0
    %515 = vmatpush1.bf16.msra.mxu0 0
    %516 = vmatprep.mubr.bf16.mxu0 0
    %517 = vmatmul.mubr.bf16.gmra.mrb[0].mxu0 %v401
    %v518 = vpop.f32.mrb[0].mxu0
    %v519 = vadd.f32 %v114, %v518
    %v520 = vpop.f32.mrb[0].mxu0
    %v521 = vadd.f32 %v118, %v520
    %v522 = vpop.f32.mrb[0].mxu0
    %v523 = vpop.f32.mrb[0].mxu0
    %524 = vdwg.mxu0
    %525 = vmatprep.subr.bf16.mxu0 %v313
    %526 = vmatpush1.bf16.msra.mxu0 %v312
    %527 = vmatprep.subr.bf16.mxu0 %v326
    %528 = vmatpush1.bf16.msra.mxu0 %v325
    %529 = vmatprep.subr.bf16.mxu0 %v339
    %530 = vmatpush1.bf16.msra.mxu0 %v338
    %531 = vmatprep.subr.bf16.mxu0 %v420
    %532 = vmatpush1.bf16.msra.mxu0 %v417
    %533 = vmatprep.subr.bf16.mxu0 0
    %534 = vmatpush1.bf16.msra.mxu0 0
    %535 = vmatprep.subr.bf16.mxu0 0
    %536 = vmatpush1.bf16.msra.mxu0 0
    %537 = vmatprep.subr.bf16.mxu0 0
    %538 = vmatpush1.bf16.msra.mxu0 0
    %539 = vmatprep.subr.bf16.mxu0 0
    %540 = vmatpush1.bf16.msra.mxu0 0
    %541 = vmatprep.subr.bf16.mxu0 0
    %542 = vmatpush1.bf16.msra.mxu0 0
    %543 = vmatprep.subr.bf16.mxu0 0
    %544 = vmatpush1.bf16.msra.mxu0 0
    %545 = vmatprep.subr.bf16.mxu0 0
    %546 = vmatpush1.bf16.msra.mxu0 0
    %547 = vmatprep.subr.bf16.mxu0 0
    %548 = vmatpush1.bf16.msra.mxu0 0
    %549 = vmatprep.subr.bf16.mxu0 0
    %550 = vmatpush1.bf16.msra.mxu0 0
    %551 = vmatprep.subr.bf16.mxu0 0
    %552 = vmatpush1.bf16.msra.mxu0 0
    %553 = vmatprep.subr.bf16.mxu0 0
    %554 = vmatpush1.bf16.msra.mxu0 0
    %555 = vmatprep.subr.bf16.mxu0 0
    %556 = vmatpush1.bf16.msra.mxu0 0
    %557 = vmatprep.mubr.bf16.mxu0 0
    %558 = vmatmul.mubr.bf16.gmra.mrb[0].mxu0 %v401
    %v559 = vpop.f32.mrb[0].mxu0
    %v560 = vadd.f32 %v122, %v559
    %v561 = vpop.f32.mrb[0].mxu0
    %v562 = vadd.f32 %v126, %v561
    %v563 = vpop.f32.mrb[0].mxu0
    %v564 = vpop.f32.mrb[0].mxu0
    %565 = vdwg.mxu0
    %566 = vmatprep.subr.bf16.mxu0 %v315
    %567 = vmatpush1.bf16.msra.mxu0 %v314
    %568 = vmatprep.subr.bf16.mxu0 %v328
    %569 = vmatpush1.bf16.msra.mxu0 %v327
    %570 = vmatprep.subr.bf16.mxu0 %v341
    %571 = vmatpush1.bf16.msra.mxu0 %v340
    %572 = vmatprep.subr.bf16.mxu0 %v426
    %573 = vmatpush1.bf16.msra.mxu0 %v423
    %574 = vmatprep.subr.bf16.mxu0 0
    %575 = vmatpush1.bf16.msra.mxu0 0
    %576 = vmatprep.subr.bf16.mxu0 0
    %577 = vmatpush1.bf16.msra.mxu0 0
    %578 = vmatprep.subr.bf16.mxu0 0
    %579 = vmatpush1.bf16.msra.mxu0 0
    %580 = vmatprep.subr.bf16.mxu0 0
    %581 = vmatpush1.bf16.msra.mxu0 0
    %582 = vmatprep.subr.bf16.mxu0 0
    %583 = vmatpush1.bf16.msra.mxu0 0
    %584 = vmatprep.subr.bf16.mxu0 0
    %585 = vmatpush1.bf16.msra.mxu0 0
    %586 = vmatprep.subr.bf16.mxu0 0
    %587 = vmatpush1.bf16.msra.mxu0 0
    %588 = vmatprep.subr.bf16.mxu0 0
    %589 = vmatpush1.bf16.msra.mxu0 0
    %590 = vmatprep.subr.bf16.mxu0 0
    %591 = vmatpush1.bf16.msra.mxu0 0
    %592 = vmatprep.subr.bf16.mxu0 0
    %593 = vmatpush1.bf16.msra.mxu0 0
    %594 = vmatprep.subr.bf16.mxu0 0
    %595 = vmatpush1.bf16.msra.mxu0 0
    %596 = vmatprep.subr.bf16.mxu0 0
    %597 = vmatpush1.bf16.msra.mxu0 0
    %598 = vmatprep.mubr.bf16.mxu0 0
    %599 = vmatmul.mubr.bf16.gmra.mrb[0].mxu0 %v401
    %v600 = vpop.f32.mrb[0].mxu0
    %v601 = vadd.f32 %v130, %v600
    %v602 = vpop.f32.mrb[0].mxu0
    %v603 = vadd.f32 %v134, %v602
    %v604 = vpop.f32.mrb[0].mxu0
    %v605 = vpop.f32.mrb[0].mxu0
    %606 = vdwg.mxu0
    %607 = vmatprep.subr.bf16.mxu0 %v317
    %608 = vmatpush1.bf16.msra.mxu0 %v316
    %609 = vmatprep.subr.bf16.mxu0 %v330
    %610 = vmatpush1.bf16.msra.mxu0 %v329
    %611 = vmatprep.subr.bf16.mxu0 %v343
    %612 = vmatpush1.bf16.msra.mxu0 %v342
    %613 = vmatprep.subr.bf16.mxu0 %v432
    %614 = vmatpush1.bf16.msra.mxu0 %v429
    %615 = vmatprep.subr.bf16.mxu0 0
    %616 = vmatpush1.bf16.msra.mxu0 0
    %617 = vmatprep.subr.bf16.mxu0 0
    %618 = vmatpush1.bf16.msra.mxu0 0
    %619 = vmatprep.subr.bf16.mxu0 0
    %620 = vmatpush1.bf16.msra.mxu0 0
    %621 = vmatprep.subr.bf16.mxu0 0
    %622 = vmatpush1.bf16.msra.mxu0 0
    %623 = vmatprep.subr.bf16.mxu0 0
    %624 = vmatpush1.bf16.msra.mxu0 0
    %625 = vmatprep.subr.bf16.mxu0 0
    %626 = vmatpush1.bf16.msra.mxu0 0
    %627 = vmatprep.subr.bf16.mxu0 0
    %628 = vmatpush1.bf16.msra.mxu0 0
    %629 = vmatprep.subr.bf16.mxu0 0
    %630 = vmatpush1.bf16.msra.mxu0 0
    %631 = vmatprep.subr.bf16.mxu0 0
    %632 = vmatpush1.bf16.msra.mxu0 0
    %633 = vmatprep.subr.bf16.mxu0 0
    %634 = vmatpush1.bf16.msra.mxu0 0
    %635 = vmatprep.subr.bf16.mxu0 0
    %636 = vmatpush1.bf16.msra.mxu0 0
    %637 = vmatprep.subr.bf16.mxu0 0
    %638 = vmatpush1.bf16.msra.mxu0 0
    %639 = vmatprep.mubr.bf16.mxu0 0
    %640 = vmatmul.mubr.bf16.gmra.mrb[0].mxu0 %v401
    %v641 = vpop.f32.mrb[0].mxu0
    %v642 = vadd.f32 %v138, %v641
    %v643 = vpop.f32.mrb[0].mxu0
    %v644 = vadd.f32 %v142, %v643
    %v645 = vpop.f32.mrb[0].mxu0
    %v646 = vpop.f32.mrb[0].mxu0
    %647 = vdwg.mxu0
    %648 = vmatprep.subr.bf16.mxu0 %v319
    %649 = vmatpush1.bf16.msra.mxu0 %v318
    %650 = vmatprep.subr.bf16.mxu0 %v332
    %651 = vmatpush1.bf16.msra.mxu0 %v331
    %652 = vmatprep.subr.bf16.mxu0 %v345
    %653 = vmatpush1.bf16.msra.mxu0 %v344
    %654 = vmatprep.subr.bf16.mxu0 %v438
    %655 = vmatpush1.bf16.msra.mxu0 %v435
    %656 = vmatprep.subr.bf16.mxu0 0
    %657 = vmatpush1.bf16.msra.mxu0 0
    %658 = vmatprep.subr.bf16.mxu0 0
    %659 = vmatpush1.bf16.msra.mxu0 0
    %660 = vmatprep.subr.bf16.mxu0 0
    %661 = vmatpush1.bf16.msra.mxu0 0
    %662 = vmatprep.subr.bf16.mxu0 0
    %663 = vmatpush1.bf16.msra.mxu0 0
    %664 = vmatprep.subr.bf16.mxu0 0
    %665 = vmatpush1.bf16.msra.mxu0 0
    %666 = vmatprep.subr.bf16.mxu0 0
    %667 = vmatpush1.bf16.msra.mxu0 0
    %668 = vmatprep.subr.bf16.mxu0 0
    %669 = vmatpush1.bf16.msra.mxu0 0
    %670 = vmatprep.subr.bf16.mxu0 0
    %671 = vmatpush1.bf16.msra.mxu0 0
    %672 = vmatprep.subr.bf16.mxu0 0
    %673 = vmatpush1.bf16.msra.mxu0 0
    %674 = vmatprep.subr.bf16.mxu0 0
    %675 = vmatpush1.bf16.msra.mxu0 0
    %676 = vmatprep.subr.bf16.mxu0 0
    %677 = vmatpush1.bf16.msra.mxu0 0
    %678 = vmatprep.subr.bf16.mxu0 0
    %679 = vmatpush1.bf16.msra.mxu0 0
    %680 = vmatprep.mubr.bf16.mxu0 0
    %681 = vmatmul.mubr.bf16.gmra.mrb[0].mxu0 %v401
    %v682 = vpop.f32.mrb[0].mxu0
    %v683 = vadd.f32 %v146, %v682
    %v684 = vpop.f32.mrb[0].mxu0
    %v685 = vadd.f32 %v150, %v684
    %v686 = vpop.f32.mrb[0].mxu0
    %v687 = vpop.f32.mrb[0].mxu0
    %688 = vdwg.mxu0
    %689 = vmatprep.subr.bf16.mxu0 0
    %690 = vmatpush1.bf16.msra.mxu0 %v320
    %691 = vmatprep.subr.bf16.mxu0 0
    %692 = vmatpush1.bf16.msra.mxu0 %v333
    %693 = vmatprep.subr.bf16.mxu0 0
    %694 = vmatpush1.bf16.msra.mxu0 %v346
    %695 = vmatprep.subr.bf16.mxu0 0
    %696 = vmatpush1.bf16.msra.mxu0 %v441
    %697 = vmatprep.subr.bf16.mxu0 0
    %698 = vmatpush1.bf16.msra.mxu0 0
    %699 = vmatprep.subr.bf16.mxu0 0
    %700 = vmatpush1.bf16.msra.mxu0 0
    %701 = vmatprep.subr.bf16.mxu0 0
    %702 = vmatpush1.bf16.msra.mxu0 0
    %703 = vmatprep.subr.bf16.mxu0 0
    %704 = vmatpush1.bf16.msra.mxu0 0
    %705 = vmatprep.subr.bf16.mxu0 0
    %706 = vmatpush1.bf16.msra.mxu0 0
    %707 = vmatprep.subr.bf16.mxu0 0
    %708 = vmatpush1.bf16.msra.mxu0 0
    %709 = vmatprep.subr.bf16.mxu0 0
    %710 = vmatpush1.bf16.msra.mxu0 0
    %711 = vmatprep.subr.bf16.mxu0 0
    %712 = vmatpush1.bf16.msra.mxu0 0
    %713 = vmatprep.subr.bf16.mxu0 0
    %714 = vmatpush1.bf16.msra.mxu0 0
    %715 = vmatprep.subr.bf16.mxu0 0
    %716 = vmatpush1.bf16.msra.mxu0 0
    %717 = vmatprep.subr.bf16.mxu0 0
    %718 = vmatpush1.bf16.msra.mxu0 0
    %719 = vmatprep.subr.bf16.mxu0 0
    %720 = vmatpush1.bf16.msra.mxu0 0
    %721 = vmatprep.mubr.bf16.mxu0 0
    %722 = vmatmul.mubr.bf16.gmra.mrb[0].mxu0 %v401
    %v723 = vpop.f32.mrb[0].mxu0
    %v724 = vadd.f32 %v154, %v723
    %v725 = vpop.f32.mrb[0].mxu0
    %v726 = vpop.f32.mrb[0].mxu0
    %v727 = vpop.f32.mrb[0].mxu0
    %728 = vdwg.mxu0
    %v729 = vmax.f32 %v478, 0.0
    %v730 = vmax.f32 %v480, 0.0
    %v731 = vmax.f32 %v519, 0.0
    %v732 = vmax.f32 %v521, 0.0
    %v733 = vmax.f32 %v560, 0.0
    %v734 = vmax.f32 %v562, 0.0
    %v735 = vmax.f32 %v601, 0.0
    %v736 = vmax.f32 %v603, 0.0
    %v737 = vmax.f32 %v642, 0.0
    %v738 = vmax.f32 %v644, 0.0
    %v739 = vmax.f32 %v683, 0.0
    %v740 = vmax.f32 %v685, 0.0
    %v741 = vmax.f32 %v724, 0.0
    %v742 = vpack.c.bf16 %v729, %v729
    %v743 = vpack.c.bf16 %v730, %v730
    %v744 = vpack.c.bf16 %v731, %v731
    %v745 = vpack.c.bf16 %v732, %v732
    %v746 = vpack.c.bf16 %v733, %v733
    %v747 = vpack.c.bf16 %v734, %v734
    %v748 = vpack.c.bf16 %v735, %v735
    %v749 = vpack.c.bf16 %v736, %v736
    %v750 = vpack.c.bf16 %v737, %v737
    %v751 = vpack.c.bf16 %v738, %v738
    %v752 = vpack.c.bf16 %v739, %v739
    %v753 = vpack.c.bf16 %v740, %v740
    %v754 = vpack.c.bf16 %v741, %v741
    %v755 = vld [vmem:[#allocation4] sm:$0xf]
    %v756 = vld [vmem:[#allocation4 + $0x4] sm:$0xf]
    %v757 = vld [vmem:[#allocation4 + $0x8] sm:$0xf]
    %v758 = vld [vmem:[#allocation4 + $0xc] sm:$0xf]
    %v759 = vld [vmem:[#allocation4 + $0x10] sm:$0xf]
    %v760 = vld [vmem:[#allocation4 + $0x14] sm:$0xf]
    %v761 = vld [vmem:[#allocation4 + $0x18] sm:$0xf]
    %v762 = vld [vmem:[#allocation4 + $0x1c] sm:$0xf]
    %v763 = vld [vmem:[#allocation4 + $0x20] sm:$0xf]
    %v764 = vld [vmem:[#allocation4 + $0x24] sm:$0xf]
    %v765 = vld [vmem:[#allocation4 + $0x28] sm:$0xf]
    %v766 = vld [vmem:[#allocation4 + $0x2c] sm:$0xf]
    %v767 = vld [vmem:[#allocation4 + $0x30] sm:$0xf]
    %v768 = vld [vmem:[#allocation4 + $0x34] sm:$0xf]
    %v769 = vld [vmem:[#allocation4 + $0x38] sm:$0xf]
    %v770 = vld [vmem:[#allocation4 + $0x3c] sm:$0xf]
    %v771 = vld [vmem:[#allocation4 + $0x40] sm:$0xf]
    %v772 = vld [vmem:[#allocation4 + $0x44] sm:$0xf]
    %v773 = vld [vmem:[#allocation4 + $0x48] sm:$0xf]
    %v774 = vld [vmem:[#allocation4 + $0x4c] sm:$0xf]
    %v775 = vld [vmem:[#allocation4 + $0x50] sm:$0xf]
    %v776 = vld [vmem:[#allocation4 + $0x54] sm:$0xf]
    %v777 = vld [vmem:[#allocation4 + $0x58] sm:$0xf]
    %v778 = vld [vmem:[#allocation4 + $0x5c] sm:$0xf]
    %v779 = vld [vmem:[#allocation4 + $0x60] sm:$0xf]
    %v780 = vld [vmem:[#allocation4 + $0x64] sm:$0xf]
    %v781 = vld [vmem:[#allocation4 + $0x68] sm:$0xf]
    %v782 = vld [vmem:[#allocation4 + $0x6c] sm:$0xf]
    %v783 = vld [vmem:[#allocation4 + $0x70] sm:$0xf]
    %v784 = vld [vmem:[#allocation4 + $0x74] sm:$0xf]
    %v785 = vld [vmem:[#allocation4 + $0x78] sm:$0xf]
    %v786 = vld [vmem:[#allocation4 + $0x7c] sm:$0xf]
    %v787 = vld [vmem:[#allocation4 + $0x80] sm:$0xf]
    %v788 = vld [vmem:[#allocation4 + $0x84] sm:$0xf]
    %v789 = vld [vmem:[#allocation4 + $0x88] sm:$0xf]
    %v790 = vld [vmem:[#allocation4 + $0x8c] sm:$0xf]
    %v791 = vld [vmem:[#allocation4 + $0x90] sm:$0xf]
    %v792 = vld [vmem:[#allocation4 + $0x94] sm:$0xf]
    %v793 = vld [vmem:[#allocation4 + $0x98] sm:$0xf]
    %v794 = vld [vmem:[#allocation4 + $0x9c] sm:$0xf]
    %v795 = vld [vmem:[#allocation4 + $0xa0] sm:$0xf]
    %v796 = vld [vmem:[#allocation4 + $0xa4] sm:$0xf]
    %v797 = vld [vmem:[#allocation4 + $0xa8] sm:$0xf]
    %v798 = vld [vmem:[#allocation4 + $0xac] sm:$0xf]
    %v799 = vld [vmem:[#allocation4 + $0xb0] sm:$0xf]
    %v800 = vld [vmem:[#allocation4 + $0xb4] sm:$0xf]
    %v801 = vld [vmem:[#allocation4 + $0xb8] sm:$0xf]
    %v802 = vld [vmem:[#allocation4 + $0xbc] sm:$0xf]
    %v803 = vld [vmem:[#allocation4 + $0xc0] sm:$0xf]
    %v804 = vld [vmem:[#allocation4 + $0xc4] sm:$0xf]
    %v805 = vld [vmem:[#allocation4 + $0xc8] sm:$0xf]
    %v806 = vld [vmem:[#allocation4 + $0xcc] sm:$0xf]
    %v807 = vld [vmem:[#allocation4 + $0xd0] sm:$0xf]
    %v808 = vld [vmem:[#allocation4 + $0xd4] sm:$0xf]
    %v809 = vld [vmem:[#allocation4 + $0xd8] sm:$0xf]
    %v810 = vld [vmem:[#allocation4 + $0xdc] sm:$0xf]
    %v811 = vld [vmem:[#allocation4 + $0xe0] sm:$0xf]
    %v812 = vld [vmem:[#allocation4 + $0xe4] sm:$0xf]
    %v813 = vld [vmem:[#allocation4 + $0xe8] sm:$0xf]
    %v814 = vld [vmem:[#allocation4 + $0xec] sm:$0xf]
    %v815 = vld [vmem:[#allocation4 + $0xf0] sm:$0xf]
    %v816 = vld [vmem:[#allocation4 + $0xf4] sm:$0xf]
    %v817 = vld [vmem:[#allocation4 + $0xf8] sm:$0xf]
    %v818 = vld [vmem:[#allocation4 + $0xfc] sm:$0xf]
    %v819 = vld [vmem:[#allocation4 + $0x100] sm:$0xf]
    %v820 = vld [vmem:[#allocation4 + $0x104] sm:$0xf]
    %v821 = vld [vmem:[#allocation4 + $0x108] sm:$0xf]
    %v822 = vld [vmem:[#allocation4 + $0x10c] sm:$0xf]
    %v823 = vld [vmem:[#allocation4 + $0x110] sm:$0xf]
    %v824 = vld [vmem:[#allocation4 + $0x114] sm:$0xf]
    %v825 = vld [vmem:[#allocation4 + $0x118] sm:$0xf]
    %v826 = vld [vmem:[#allocation4 + $0x11c] sm:$0xf]
    %v827 = vld [vmem:[#allocation4 + $0x120] sm:$0xf]
    %v828 = vld [vmem:[#allocation4 + $0x124] sm:$0xf]
    %v829 = vld [vmem:[#allocation4 + $0x128] sm:$0xf]
    %v830 = vld [vmem:[#allocation4 + $0x12c] sm:$0xf]
    %v831 = vld [vmem:[#allocation4 + $0x130] sm:$0xf]
    %v832 = vld [vmem:[#allocation4 + $0x134] sm:$0xf]
    %v833 = vld [vmem:[#allocation4 + $0x138] sm:$0xf]
    %v834 = vld [vmem:[#allocation4 + $0x13c] sm:$0xf]
    %v835 = vld [vmem:[#allocation4 + $0x140] sm:$0xf]
    %v836 = vld [vmem:[#allocation4 + $0x144] sm:$0xf]
    %v837 = vld [vmem:[#allocation4 + $0x148] sm:$0xf]
    %v838 = vld [vmem:[#allocation4 + $0x14c] sm:$0xf]
    %v839 = vld [vmem:[#allocation4 + $0x150] sm:$0xf]
    %v840 = vld [vmem:[#allocation4 + $0x154] sm:$0xf]
    %v841 = vld [vmem:[#allocation4 + $0x158] sm:$0xf]
    %v842 = vld [vmem:[#allocation4 + $0x15c] sm:$0xf]
    %v843 = vld [vmem:[#allocation4 + $0x160] sm:$0xf]
    %v844 = vld [vmem:[#allocation4 + $0x164] sm:$0xf]
    %v845 = vld [vmem:[#allocation4 + $0x168] sm:$0xf]
    %v846 = vld [vmem:[#allocation4 + $0x16c] sm:$0xf]
    %v847 = vld [vmem:[#allocation4 + $0x170] sm:$0xf]
    %v848 = vld [vmem:[#allocation4 + $0x174] sm:$0xf]
    %v849 = vld [vmem:[#allocation4 + $0x178] sm:$0xf]
    %v850 = vld [vmem:[#allocation4 + $0x17c] sm:$0xf]
    %v851 = vld [vmem:[#allocation4 + $0x180] sm:$0xf]
    %v852 = vld [vmem:[#allocation4 + $0x184] sm:$0xf]
    %v853 = vld [vmem:[#allocation4 + $0x188] sm:$0xf]
    %v854 = vld [vmem:[#allocation4 + $0x18c] sm:$0xf]
    %v855 = vld [vmem:[#allocation4 + $0x190] sm:$0xf]
    %v856 = vld [vmem:[#allocation4 + $0x194] sm:$0xf]
    %v857 = vld [vmem:[#allocation4 + $0x198] sm:$0xf]
    %v858 = vld [vmem:[#allocation4 + $0x19c] sm:$0xf]
    %v859 = vld [vmem:[#allocation4 + $0x1a0] sm:$0xf]
    %v860 = vld [vmem:[#allocation4 + $0x1a4] sm:$0xf]
    %v861 = vld [vmem:[#allocation4 + $0x1a8] sm:$0xf]
    %v862 = vld [vmem:[#allocation4 + $0x1ac] sm:$0xf]
    %v863 = vld [vmem:[#allocation4 + $0x1b0] sm:$0xf]
    %v864 = vld [vmem:[#allocation4 + $0x1b4] sm:$0xf]
    %v865 = vld [vmem:[#allocation4 + $0x1b8] sm:$0xf]
    %v866 = vld [vmem:[#allocation4 + $0x1bc] sm:$0xf]
    %v867 = vld [vmem:[#allocation4 + $0x1c0] sm:$0xf]
    %v868 = vld [vmem:[#allocation4 + $0x1c4] sm:$0xf]
    %v869 = vld [vmem:[#allocation4 + $0x1c8] sm:$0xf]
    %v870 = vld [vmem:[#allocation4 + $0x1cc] sm:$0xf]
    %v871 = vld [vmem:[#allocation4 + $0x1d0] sm:$0xf]
    %v872 = vld [vmem:[#allocation4 + $0x1d4] sm:$0xf]
    %v873 = vld [vmem:[#allocation4 + $0x1d8] sm:$0xf]
    %v874 = vld [vmem:[#allocation4 + $0x1dc] sm:$0xf]
    %v875 = vld [vmem:[#allocation4 + $0x1e0] sm:$0xf]
    %v876 = vld [vmem:[#allocation4 + $0x1e4] sm:$0xf]
    %v877 = vld [vmem:[#allocation4 + $0x1e8] sm:$0xf]
    %v878 = vld [vmem:[#allocation4 + $0x1ec] sm:$0xf]
    %v879 = vld [vmem:[#allocation4 + $0x1f0] sm:$0xf]
    %v880 = vld [vmem:[#allocation4 + $0x1f4] sm:$0xf]
    %v881 = vld [vmem:[#allocation4 + $0x1f8] sm:$0xf]
    %v882 = vld [vmem:[#allocation4 + $0x1fc] sm:$0xf]
    %v883 = vld [vmem:[#allocation4 + $0x200] sm:$0xf]
    %v884 = vld [vmem:[#allocation4 + $0x204] sm:$0xf]
    %v885 = vld [vmem:[#allocation4 + $0x208] sm:$0xf]
    %v886 = vld [vmem:[#allocation4 + $0x20c] sm:$0xf]
    %v887 = vld [vmem:[#allocation4 + $0x210] sm:$0xf]
    %v888 = vld [vmem:[#allocation4 + $0x214] sm:$0xf]
    %v889 = vld [vmem:[#allocation4 + $0x218] sm:$0xf]
    %v890 = vld [vmem:[#allocation4 + $0x21c] sm:$0xf]
    %v891 = vld [vmem:[#allocation4 + $0x220] sm:$0xf]
    %v892 = vld [vmem:[#allocation4 + $0x224] sm:$0xf]
    %v893 = vld [vmem:[#allocation4 + $0x228] sm:$0xf]
    %v894 = vld [vmem:[#allocation4 + $0x22c] sm:$0xf]
    %v895 = vld [vmem:[#allocation4 + $0x230] sm:$0xf]
    %v896 = vld [vmem:[#allocation4 + $0x234] sm:$0xf]
    %v897 = vld [vmem:[#allocation4 + $0x238] sm:$0xf]
    %v898 = vld [vmem:[#allocation4 + $0x23c] sm:$0xf]
    %v899 = vld [vmem:[#allocation4 + $0x240] sm:$0xf]
    %v900 = vld [vmem:[#allocation4 + $0x244] sm:$0xf]
    %v901 = vld [vmem:[#allocation4 + $0x248] sm:$0xf]
    %v902 = vld [vmem:[#allocation4 + $0x24c] sm:$0xf]
    %v903 = vld [vmem:[#allocation4 + $0x250] sm:$0xf]
    %v904 = vld [vmem:[#allocation4 + $0x254] sm:$0xf]
    %v905 = vld [vmem:[#allocation4 + $0x258] sm:$0xf]
    %v906 = vld [vmem:[#allocation4 + $0x25c] sm:$0xf]
    %v907 = vld [vmem:[#allocation4 + $0x260] sm:$0xf]
    %v908 = vld [vmem:[#allocation4 + $0x264] sm:$0xf]
    %v909 = vld [vmem:[#allocation4 + $0x268] sm:$0xf]
    %v910 = vld [vmem:[#allocation4 + $0x26c] sm:$0xf]
    %v911 = vld [vmem:[#allocation4 + $0x270] sm:$0xf]
    %v912 = vld [vmem:[#allocation4 + $0x274] sm:$0xf]
    %v913 = vld [vmem:[#allocation4 + $0x278] sm:$0xf]
    %v914 = vld [vmem:[#allocation4 + $0x27c] sm:$0xf]
    %v915 = vld [vmem:[#allocation4 + $0x280] sm:$0xf]
    %v916 = vld [vmem:[#allocation4 + $0x284] sm:$0xf]
    %v917 = vld [vmem:[#allocation4 + $0x288] sm:$0xf]
    %v918 = vld [vmem:[#allocation4 + $0x28c] sm:$0xf]
    %v919 = vld [vmem:[#allocation4 + $0x290] sm:$0xf]
    %v920 = vld [vmem:[#allocation4 + $0x294] sm:$0xf]
    %v921 = vld [vmem:[#allocation4 + $0x298] sm:$0xf]
    %v922 = vld [vmem:[#allocation4 + $0x29c] sm:$0xf]
    %v923 = vld [vmem:[#allocation4 + $0x2a0] sm:$0xf]
    %v924 = vld [vmem:[#allocation4 + $0x2a4] sm:$0xf]
    %v925 = vld [vmem:[#allocation4 + $0x2a8] sm:$0xf]
    %v926 = vld [vmem:[#allocation4 + $0x2ac] sm:$0xf]
    %v927 = vld [vmem:[#allocation4 + $0x2b0] sm:$0xf]
    %v928 = vld [vmem:[#allocation4 + $0x2b4] sm:$0xf]
    %v929 = vld [vmem:[#allocation4 + $0x2b8] sm:$0xf]
    %v930 = vld [vmem:[#allocation4 + $0x2bc] sm:$0xf]
    %v931 = vld [vmem:[#allocation4 + $0x2c0] sm:$0xf]
    %v932 = vld [vmem:[#allocation4 + $0x2c4] sm:$0xf]
    %v933 = vld [vmem:[#allocation4 + $0x2c8] sm:$0xf]
    %v934 = vld [vmem:[#allocation4 + $0x2cc] sm:$0xf]
    %v935 = vld [vmem:[#allocation4 + $0x2d0] sm:$0xf]
    %v936 = vld [vmem:[#allocation4 + $0x2d4] sm:$0xf]
    %v937 = vld [vmem:[#allocation4 + $0x2d8] sm:$0xf]
    %v938 = vld [vmem:[#allocation4 + $0x2dc] sm:$0xf]
    %v939 = vld [vmem:[#allocation4 + $0x2e0] sm:$0xf]
    %v940 = vld [vmem:[#allocation4 + $0x2e4] sm:$0xf]
    %v941 = vld [vmem:[#allocation4 + $0x2e8] sm:$0xf]
    %v942 = vld [vmem:[#allocation4 + $0x2ec] sm:$0xf]
    %v943 = vld [vmem:[#allocation4 + $0x2f0] sm:$0xf]
    %v944 = vld [vmem:[#allocation4 + $0x2f4] sm:$0xf]
    %v945 = vld [vmem:[#allocation4 + $0x2f8] sm:$0xf]
    %v946 = vld [vmem:[#allocation4 + $0x2fc] sm:$0xf]
    %v947 = vld [vmem:[#allocation4 + $0x300] sm:$0xf]
    %v948 = vld [vmem:[#allocation4 + $0x304] sm:$0xf]
    %v949 = vld [vmem:[#allocation4 + $0x308] sm:$0xf]
    %v950 = vld [vmem:[#allocation4 + $0x30c] sm:$0xf]
    %v951 = vld [vmem:[#allocation4 + $0x310] sm:$0xf]
    %v952 = vld [vmem:[#allocation4 + $0x314] sm:$0xf]
    %v953 = vld [vmem:[#allocation4 + $0x318] sm:$0xf]
    %v954 = vld [vmem:[#allocation4 + $0x31c] sm:$0xf]
    %v955 = vld [vmem:[#allocation4 + $0x320] sm:$0xf]
    %v956 = vld [vmem:[#allocation4 + $0x324] sm:$0xf]
    %v957 = vld [vmem:[#allocation4 + $0x328] sm:$0xf]
    %v958 = vld [vmem:[#allocation4 + $0x32c] sm:$0xf]
    %v959 = vld [vmem:[#allocation4 + $0x330] sm:$0xf]
    %v960 = vld [vmem:[#allocation4 + $0x334] sm:$0xf]
    %v961 = vld [vmem:[#allocation4 + $0x338] sm:$0xf]
    %v962 = vld [vmem:[#allocation4 + $0x33c] sm:$0xf]
    %v963 = vld [vmem:[%s4] sm:$0x1]
    %v965 = vlaneseq
    %v966 = vshrl.u32 %v965, 7
    %v967 = vsub.s32 0, %v966
    %v968 = vrot.slane %v963, %v967
    %v1178 = vunpack.c.l.b16 %v755
    %v1179 = vunpack.c.l.b16 %v756
    %v1180 = vunpack.c.l.b16 %v757
    %v1181 = vunpack.c.l.b16 %v758
    %v1182 = vunpack.c.l.b16 %v759
    %v1183 = vunpack.c.l.b16 %v760
    %v1184 = vunpack.c.l.b16 %v761
    %v1185 = vunpack.c.l.b16 %v762
    %v1186 = vunpack.c.l.b16 %v763
    %v1187 = vunpack.c.l.b16 %v764
    %v1188 = vunpack.c.l.b16 %v765
    %v1189 = vunpack.c.l.b16 %v766
    %v1190 = vunpack.c.l.b16 %v767
    %v1191 = vunpack.c.l.b16 %v768
    %v1192 = vunpack.c.l.b16 %v769
    %v1193 = vunpack.c.l.b16 %v770
    %v1194 = vunpack.c.l.b16 %v771
    %v1195 = vunpack.c.l.b16 %v772
    %v1196 = vunpack.c.l.b16 %v773
    %v1197 = vunpack.c.l.b16 %v774
    %v1198 = vunpack.c.l.b16 %v775
    %v1199 = vunpack.c.l.b16 %v776
    %v1200 = vunpack.c.l.b16 %v777
    %v1201 = vunpack.c.l.b16 %v778
    %v1202 = vunpack.c.l.b16 %v779
    %v1203 = vunpack.c.l.b16 %v780
    %v1204 = vunpack.c.l.b16 %v781
    %v1205 = vunpack.c.l.b16 %v782
    %v1206 = vunpack.c.l.b16 %v783
    %v1207 = vunpack.c.l.b16 %v784
    %v1208 = vunpack.c.l.b16 %v785
    %v1209 = vunpack.c.l.b16 %v786
    %v1210 = vunpack.c.l.b16 %v787
    %v1211 = vunpack.c.l.b16 %v788
    %v1212 = vunpack.c.l.b16 %v789
    %v1213 = vunpack.c.l.b16 %v790
    %v1214 = vunpack.c.l.b16 %v791
    %v1215 = vunpack.c.l.b16 %v792
    %v1216 = vunpack.c.l.b16 %v793
    %v1217 = vunpack.c.l.b16 %v794
    %v1218 = vunpack.c.l.b16 %v795
    %v1219 = vunpack.c.l.b16 %v796
    %v1220 = vunpack.c.l.b16 %v797
    %v1221 = vunpack.c.l.b16 %v798
    %v1222 = vunpack.c.l.b16 %v799
    %v1223 = vunpack.c.l.b16 %v800
    %v1224 = vunpack.c.l.b16 %v801
    %v1225 = vunpack.c.l.b16 %v802
    %v1226 = vunpack.c.l.b16 %v803
    %v1227 = vunpack.c.l.b16 %v804
    %v1228 = vunpack.c.l.b16 %v805
    %v1229 = vunpack.c.l.b16 %v806
    %v1230 = vunpack.c.l.b16 %v807
    %v1231 = vunpack.c.l.b16 %v808
    %v1232 = vunpack.c.l.b16 %v809
    %v1233 = vunpack.c.l.b16 %v810
    %v1234 = vunpack.c.l.b16 %v811
    %v1235 = vunpack.c.l.b16 %v812
    %v1236 = vunpack.c.l.b16 %v813
    %v1237 = vunpack.c.l.b16 %v814
    %v1238 = vunpack.c.l.b16 %v815
    %v1239 = vunpack.c.l.b16 %v816
    %v1240 = vunpack.c.l.b16 %v817
    %v1241 = vunpack.c.l.b16 %v818
    %v1242 = vunpack.c.l.b16 %v819
    %v1243 = vunpack.c.l.b16 %v820
    %v1244 = vunpack.c.l.b16 %v821
    %v1245 = vunpack.c.l.b16 %v822
    %v1246 = vunpack.c.l.b16 %v823
    %v1247 = vunpack.c.l.b16 %v824
    %v1248 = vunpack.c.l.b16 %v825
    %v1249 = vunpack.c.l.b16 %v826
    %v1250 = vunpack.c.l.b16 %v827
    %v1251 = vunpack.c.l.b16 %v828
    %v1252 = vunpack.c.l.b16 %v829
    %v1253 = vunpack.c.l.b16 %v830
    %v1254 = vunpack.c.l.b16 %v831
    %v1255 = vunpack.c.l.b16 %v832
    %v1256 = vunpack.c.l.b16 %v833
    %v1257 = vunpack.c.l.b16 %v834
    %v1258 = vunpack.c.l.b16 %v835
    %v1259 = vunpack.c.l.b16 %v836
    %v1260 = vunpack.c.l.b16 %v837
    %v1261 = vunpack.c.l.b16 %v838
    %v1262 = vunpack.c.l.b16 %v839
    %v1263 = vunpack.c.l.b16 %v840
    %v1264 = vunpack.c.l.b16 %v841
    %v1265 = vunpack.c.l.b16 %v842
    %v1266 = vunpack.c.l.b16 %v843
    %v1267 = vunpack.c.l.b16 %v844
    %v1268 = vunpack.c.l.b16 %v845
    %v1269 = vunpack.c.l.b16 %v846
    %v1270 = vunpack.c.l.b16 %v847
    %v1271 = vunpack.c.l.b16 %v848
    %v1272 = vunpack.c.l.b16 %v849
    %v1273 = vunpack.c.l.b16 %v850
    %v1274 = vunpack.c.l.b16 %v851
    %v1275 = vunpack.c.l.b16 %v852
    %v1276 = vunpack.c.l.b16 %v853
    %v1277 = vunpack.c.l.b16 %v854
    %v1278 = vunpack.c.l.b16 %v855
    %v1279 = vunpack.c.l.b16 %v856
    %v1280 = vunpack.c.l.b16 %v857
    %v1281 = vunpack.c.l.b16 %v858
    %v1282 = vunpack.c.l.b16 %v859
    %v1283 = vunpack.c.l.b16 %v860
    %v1284 = vunpack.c.l.b16 %v861
    %v1285 = vunpack.c.l.b16 %v862
    %v1286 = vunpack.c.l.b16 %v863
    %v1287 = vunpack.c.l.b16 %v864
    %v1288 = vunpack.c.l.b16 %v865
    %v1289 = vunpack.c.l.b16 %v866
    %v1290 = vunpack.c.l.b16 %v867
    %v1291 = vunpack.c.l.b16 %v868
    %v1292 = vunpack.c.l.b16 %v869
    %v1293 = vunpack.c.l.b16 %v870
    %v1294 = vunpack.c.l.b16 %v871
    %v1295 = vunpack.c.l.b16 %v872
    %v1296 = vunpack.c.l.b16 %v873
    %v1297 = vunpack.c.l.b16 %v874
    %v1298 = vunpack.c.l.b16 %v875
    %v1299 = vunpack.c.l.b16 %v876
    %v1300 = vunpack.c.l.b16 %v877
    %v1301 = vunpack.c.l.b16 %v878
    %v1302 = vunpack.c.l.b16 %v879
    %v1303 = vunpack.c.l.b16 %v880
    %v1304 = vunpack.c.l.b16 %v881
    %v1305 = vunpack.c.l.b16 %v882
    %v1306 = vunpack.c.l.b16 %v883
    %v1307 = vunpack.c.l.b16 %v884
    %v1308 = vunpack.c.l.b16 %v885
    %v1309 = vunpack.c.l.b16 %v886
    %v1310 = vunpack.c.l.b16 %v887
    %v1311 = vunpack.c.l.b16 %v888
    %v1312 = vunpack.c.l.b16 %v889
    %v1313 = vunpack.c.l.b16 %v890
    %v1314 = vunpack.c.l.b16 %v891
    %v1315 = vunpack.c.l.b16 %v892
    %v1316 = vunpack.c.l.b16 %v893
    %v1317 = vunpack.c.l.b16 %v894
    %v1318 = vunpack.c.l.b16 %v895
    %v1319 = vunpack.c.l.b16 %v896
    %v1320 = vunpack.c.l.b16 %v897
    %v1321 = vunpack.c.l.b16 %v898
    %v1322 = vunpack.c.l.b16 %v899
    %v1323 = vunpack.c.l.b16 %v900
    %v1324 = vunpack.c.l.b16 %v901
    %v1325 = vunpack.c.l.b16 %v902
    %v1326 = vunpack.c.l.b16 %v903
    %v1327 = vunpack.c.l.b16 %v904
    %v1328 = vunpack.c.l.b16 %v905
    %v1329 = vunpack.c.l.b16 %v906
    %v1330 = vunpack.c.l.b16 %v907
    %v1331 = vunpack.c.l.b16 %v908
    %v1332 = vunpack.c.l.b16 %v909
    %v1333 = vunpack.c.l.b16 %v910
    %v1334 = vunpack.c.l.b16 %v911
    %v1335 = vunpack.c.l.b16 %v912
    %v1336 = vunpack.c.l.b16 %v913
    %v1337 = vunpack.c.l.b16 %v914
    %v1338 = vunpack.c.l.b16 %v915
    %v1339 = vunpack.c.l.b16 %v916
    %v1340 = vunpack.c.l.b16 %v917
    %v1341 = vunpack.c.l.b16 %v918
    %v1342 = vunpack.c.l.b16 %v919
    %v1343 = vunpack.c.l.b16 %v920
    %v1344 = vunpack.c.l.b16 %v921
    %v1345 = vunpack.c.l.b16 %v922
    %v1346 = vunpack.c.l.b16 %v923
    %v1347 = vunpack.c.l.b16 %v924
    %v1348 = vunpack.c.l.b16 %v925
    %v1349 = vunpack.c.l.b16 %v926
    %v1350 = vunpack.c.l.b16 %v927
    %v1351 = vunpack.c.l.b16 %v928
    %v1352 = vunpack.c.l.b16 %v929
    %v1353 = vunpack.c.l.b16 %v930
    %v1354 = vunpack.c.l.b16 %v931
    %v1355 = vunpack.c.l.b16 %v932
    %v1356 = vunpack.c.l.b16 %v933
    %v1357 = vunpack.c.l.b16 %v934
    %v1358 = vunpack.c.l.b16 %v935
    %v1359 = vunpack.c.l.b16 %v936
    %v1360 = vunpack.c.l.b16 %v937
    %v1361 = vunpack.c.l.b16 %v938
    %v1362 = vunpack.c.l.b16 %v939
    %v1363 = vunpack.c.l.b16 %v940
    %v1364 = vunpack.c.l.b16 %v941
    %v1365 = vunpack.c.l.b16 %v942
    %v1366 = vunpack.c.l.b16 %v943
    %v1367 = vunpack.c.l.b16 %v944
    %v1368 = vunpack.c.l.b16 %v945
    %v1369 = vunpack.c.l.b16 %v946
    %v1370 = vunpack.c.l.b16 %v947
    %v1371 = vunpack.c.l.b16 %v948
    %v1372 = vunpack.c.l.b16 %v949
    %v1373 = vunpack.c.l.b16 %v950
    %v1374 = vunpack.c.l.b16 %v951
    %v1375 = vunpack.c.l.b16 %v952
    %v1376 = vunpack.c.l.b16 %v953
    %v1377 = vunpack.c.l.b16 %v954
    %v1378 = vunpack.c.l.b16 %v955
    %v1379 = vunpack.c.l.b16 %v956
    %v1380 = vunpack.c.l.b16 %v957
    %v1381 = vunpack.c.l.b16 %v958
    %v1382 = vunpack.c.l.b16 %v959
    %v1383 = vunpack.c.l.b16 %v960
    %v1384 = vunpack.c.l.b16 %v961
    %v1385 = vunpack.c.l.b16 %v962
    %v1386 = vpack.c.b16 %v1179, %v1178
    %v1387 = vpack.c.b16 %v1181, %v1180
    %v1388 = vpack.c.b16 %v1183, %v1182
    %v1389 = vpack.c.b16 %v1185, %v1184
    %v1390 = vpack.c.b16 %v1187, %v1186
    %v1391 = vpack.c.b16 %v1189, %v1188
    %v1392 = vpack.c.b16 %v1191, %v1190
    %v1393 = vpack.c.b16 %v1193, %v1192
    %v1394 = vpack.c.b16 %v1195, %v1194
    %v1395 = vpack.c.b16 %v1197, %v1196
    %v1396 = vpack.c.b16 %v1199, %v1198
    %v1397 = vpack.c.b16 %v1201, %v1200
    %v1398 = vpack.c.b16 %v1203, %v1202
    %v1399 = vpack.c.b16 %v1205, %v1204
    %v1400 = vpack.c.b16 %v1207, %v1206
    %v1401 = vpack.c.b16 %v1209, %v1208
    %v1402 = vpack.c.b16 %v1211, %v1210
    %v1403 = vpack.c.b16 %v1213, %v1212
    %v1404 = vpack.c.b16 %v1215, %v1214
    %v1405 = vpack.c.b16 %v1217, %v1216
    %v1406 = vpack.c.b16 %v1219, %v1218
    %v1407 = vpack.c.b16 %v1221, %v1220
    %v1408 = vpack.c.b16 %v1223, %v1222
    %v1409 = vpack.c.b16 %v1225, %v1224
    %v1410 = vpack.c.b16 %v1227, %v1226
    %v1411 = vpack.c.b16 %v1229, %v1228
    %v1412 = vpack.c.b16 %v1231, %v1230
    %v1413 = vpack.c.b16 %v1233, %v1232
    %v1414 = vpack.c.b16 %v1235, %v1234
    %v1415 = vpack.c.b16 %v1237, %v1236
    %v1416 = vpack.c.b16 %v1239, %v1238
    %v1417 = vpack.c.b16 %v1241, %v1240
    %v1418 = vpack.c.b16 %v1243, %v1242
    %v1419 = vpack.c.b16 %v1245, %v1244
    %v1420 = vpack.c.b16 %v1247, %v1246
    %v1421 = vpack.c.b16 %v1249, %v1248
    %v1422 = vpack.c.b16 %v1251, %v1250
    %v1423 = vpack.c.b16 %v1253, %v1252
    %v1424 = vpack.c.b16 %v1255, %v1254
    %v1425 = vpack.c.b16 %v1257, %v1256
    %v1426 = vpack.c.b16 %v1259, %v1258
    %v1427 = vpack.c.b16 %v1261, %v1260
    %v1428 = vpack.c.b16 %v1263, %v1262
    %v1429 = vpack.c.b16 %v1265, %v1264
    %v1430 = vpack.c.b16 %v1267, %v1266
    %v1431 = vpack.c.b16 %v1269, %v1268
    %v1432 = vpack.c.b16 %v1271, %v1270
    %v1433 = vpack.c.b16 %v1273, %v1272
    %v1434 = vpack.c.b16 %v1275, %v1274
    %v1435 = vpack.c.b16 %v1277, %v1276
    %v1436 = vpack.c.b16 %v1279, %v1278
    %v1437 = vpack.c.b16 %v1281, %v1280
    %v1438 = vpack.c.b16 %v1283, %v1282
    %v1439 = vpack.c.b16 %v1285, %v1284
    %v1440 = vpack.c.b16 %v1287, %v1286
    %v1441 = vpack.c.b16 %v1289, %v1288
    %v1442 = vpack.c.b16 %v1291, %v1290
    %v1443 = vpack.c.b16 %v1293, %v1292
    %v1444 = vpack.c.b16 %v1295, %v1294
    %v1445 = vpack.c.b16 %v1297, %v1296
    %v1446 = vpack.c.b16 %v1299, %v1298
    %v1447 = vpack.c.b16 %v1301, %v1300
    %v1448 = vpack.c.b16 %v1303, %v1302
    %v1449 = vpack.c.b16 %v1305, %v1304
    %v1450 = vpack.c.b16 %v1307, %v1306
    %v1451 = vpack.c.b16 %v1309, %v1308
    %v1452 = vpack.c.b16 %v1311, %v1310
    %v1453 = vpack.c.b16 %v1313, %v1312
    %v1454 = vpack.c.b16 %v1315, %v1314
    %v1455 = vpack.c.b16 %v1317, %v1316
    %v1456 = vpack.c.b16 %v1319, %v1318
    %v1457 = vpack.c.b16 %v1321, %v1320
    %v1458 = vpack.c.b16 %v1323, %v1322
    %v1459 = vpack.c.b16 %v1325, %v1324
    %v1460 = vpack.c.b16 %v1327, %v1326
    %v1461 = vpack.c.b16 %v1329, %v1328
    %v1462 = vpack.c.b16 %v1331, %v1330
    %v1463 = vpack.c.b16 %v1333, %v1332
    %v1464 = vpack.c.b16 %v1335, %v1334
    %v1465 = vpack.c.b16 %v1337, %v1336
    %v1466 = vpack.c.b16 %v1339, %v1338
    %v1467 = vpack.c.b16 %v1341, %v1340
    %v1468 = vpack.c.b16 %v1343, %v1342
    %v1469 = vpack.c.b16 %v1345, %v1344
    %v1470 = vpack.c.b16 %v1347, %v1346
    %v1471 = vpack.c.b16 %v1349, %v1348
    %v1472 = vpack.c.b16 %v1351, %v1350
    %v1473 = vpack.c.b16 %v1353, %v1352
    %v1474 = vpack.c.b16 %v1355, %v1354
    %v1475 = vpack.c.b16 %v1357, %v1356
    %v1476 = vpack.c.b16 %v1359, %v1358
    %v1477 = vpack.c.b16 %v1361, %v1360
    %v1478 = vpack.c.b16 %v1363, %v1362
    %v1479 = vpack.c.b16 %v1365, %v1364
    %v1480 = vpack.c.b16 %v1367, %v1366
    %v1481 = vpack.c.b16 %v1369, %v1368
    %v1482 = vpack.c.b16 %v1371, %v1370
    %v1483 = vpack.c.b16 %v1373, %v1372
    %v1484 = vpack.c.b16 %v1375, %v1374
    %v1485 = vpack.c.b16 %v1377, %v1376
    %v1486 = vpack.c.b16 %v1379, %v1378
    %v1487 = vpack.c.b16 %v1381, %v1380
    %v1488 = vpack.c.b16 %v1383, %v1382
    %v1489 = vpack.c.b16 %v1385, %v1384
    %1594 = vmatprep.subr.bf16.mxu0 0
    %1595 = vmatpush1.bf16.msra.mxu0 %v1386
    %1596 = vmatprep.subr.bf16.mxu0 0
    %1597 = vmatpush1.bf16.msra.mxu0 %v1387
    %1598 = vmatprep.subr.bf16.mxu0 0
    %1599 = vmatpush1.bf16.msra.mxu0 %v1388
    %1600 = vmatprep.subr.bf16.mxu0 0
    %1601 = vmatpush1.bf16.msra.mxu0 %v1389
    %1602 = vmatprep.subr.bf16.mxu0 0
    %1603 = vmatpush1.bf16.msra.mxu0 %v1390
    %1604 = vmatprep.subr.bf16.mxu0 0
    %1605 = vmatpush1.bf16.msra.mxu0 %v1391
    %1606 = vmatprep.subr.bf16.mxu0 0
    %1607 = vmatpush1.bf16.msra.mxu0 %v1392
    %1608 = vmatprep.subr.bf16.mxu0 0
    %1609 = vmatpush1.bf16.msra.mxu0 %v1393
    %1610 = vmatprep.subr.bf16.mxu0 0
    %1611 = vmatpush1.bf16.msra.mxu0 %v1394
    %1612 = vmatprep.subr.bf16.mxu0 0
    %1613 = vmatpush1.bf16.msra.mxu0 %v1395
    %1614 = vmatprep.subr.bf16.mxu0 0
    %1615 = vmatpush1.bf16.msra.mxu0 %v1396
    %1616 = vmatprep.subr.bf16.mxu0 0
    %1617 = vmatpush1.bf16.msra.mxu0 %v1397
    %1618 = vmatprep.subr.bf16.mxu0 0
    %1619 = vmatpush1.bf16.msra.mxu0 %v1398
    %1620 = vmatprep.subr.bf16.mxu0 0
    %1621 = vmatpush1.bf16.msra.mxu0 %v1399
    %1622 = vmatprep.subr.bf16.mxu0 0
    %1623 = vmatpush1.bf16.msra.mxu0 %v1400
    %1624 = vmatprep.subr.bf16.mxu0 0
    %1625 = vmatpush1.bf16.msra.mxu0 %v1401
    %1626 = vmatprep.mubr.bf16.mxu0 %v743
    %1627 = vmatmul.mubr.bf16.gmra.mrb[0].mxu0 %v742
    %v1628 = vpop.f32.mrb[0].mxu0
    %v1629 = vadd.f32 %v968, %v1628
    %v1630 = vpop.f32.mrb[0].mxu0
    %v1631 = vpop.f32.mrb[0].mxu0
    %v1632 = vpop.f32.mrb[0].mxu0
    %1633 = vdwg.mxu0
    %1634 = vmatprep.subr.bf16.mxu0 0
    %1635 = vmatpush1.bf16.msra.mxu0 %v1402
    %1636 = vmatprep.subr.bf16.mxu0 0
    %1637 = vmatpush1.bf16.msra.mxu0 %v1403
    %1638 = vmatprep.subr.bf16.mxu0 0
    %1639 = vmatpush1.bf16.msra.mxu0 %v1404
    %1640 = vmatprep.subr.bf16.mxu0 0
    %1641 = vmatpush1.bf16.msra.mxu0 %v1405
    %1642 = vmatprep.subr.bf16.mxu0 0
    %1643 = vmatpush1.bf16.msra.mxu0 %v1406
    %1644 = vmatprep.subr.bf16.mxu0 0
    %1645 = vmatpush1.bf16.msra.mxu0 %v1407
    %1646 = vmatprep.subr.bf16.mxu0 0
    %1647 = vmatpush1.bf16.msra.mxu0 %v1408
    %1648 = vmatprep.subr.bf16.mxu0 0
    %1649 = vmatpush1.bf16.msra.mxu0 %v1409
    %1650 = vmatprep.subr.bf16.mxu0 0
    %1651 = vmatpush1.bf16.msra.mxu0 %v1410
    %1652 = vmatprep.subr.bf16.mxu0 0
    %1653 = vmatpush1.bf16.msra.mxu0 %v1411
    %1654 = vmatprep.subr.bf16.mxu0 0
    %1655 = vmatpush1.bf16.msra.mxu0 %v1412
    %1656 = vmatprep.subr.bf16.mxu0 0
    %1657 = vmatpush1.bf16.msra.mxu0 %v1413
    %1658 = vmatprep.subr.bf16.mxu0 0
    %1659 = vmatpush1.bf16.msra.mxu0 %v1414
    %1660 = vmatprep.subr.bf16.mxu0 0
    %1661 = vmatpush1.bf16.msra.mxu0 %v1415
    %1662 = vmatprep.subr.bf16.mxu0 0
    %1663 = vmatpush1.bf16.msra.mxu0 %v1416
    %1664 = vmatprep.subr.bf16.mxu0 0
    %1665 = vmatpush1.bf16.msra.mxu0 %v1417
    %1666 = vmatprep.mubr.bf16.mxu0 %v745
    %1667 = vmatmul.mubr.bf16.gmra.mrb[0].mxu0 %v744
    %v1668 = vpop.f32.mrb[0].mxu0
    %v1669 = vadd.f32 %v1629, %v1668
    %v1670 = vpop.f32.mrb[0].mxu0
    %v1671 = vpop.f32.mrb[0].mxu0
    %v1672 = vpop.f32.mrb[0].mxu0
    %1673 = vdwg.mxu0
    %1674 = vmatprep.subr.bf16.mxu0 0
    %1675 = vmatpush1.bf16.msra.mxu0 %v1418
    %1676 = vmatprep.subr.bf16.mxu0 0
    %1677 = vmatpush1.bf16.msra.mxu0 %v1419
    %1678 = vmatprep.subr.bf16.mxu0 0
    %1679 = vmatpush1.bf16.msra.mxu0 %v1420
    %1680 = vmatprep.subr.bf16.mxu0 0
    %1681 = vmatpush1.bf16.msra.mxu0 %v1421
    %1682 = vmatprep.subr.bf16.mxu0 0
    %1683 = vmatpush1.bf16.msra.mxu0 %v1422
    %1684 = vmatprep.subr.bf16.mxu0 0
    %1685 = vmatpush1.bf16.msra.mxu0 %v1423
    %1686 = vmatprep.subr.bf16.mxu0 0
    %1687 = vmatpush1.bf16.msra.mxu0 %v1424
    %1688 = vmatprep.subr.bf16.mxu0 0
    %1689 = vmatpush1.bf16.msra.mxu0 %v1425
    %1690 = vmatprep.subr.bf16.mxu0 0
    %1691 = vmatpush1.bf16.msra.mxu0 %v1426
    %1692 = vmatprep.subr.bf16.mxu0 0
    %1693 = vmatpush1.bf16.msra.mxu0 %v1427
    %1694 = vmatprep.subr.bf16.mxu0 0
    %1695 = vmatpush1.bf16.msra.mxu0 %v1428
    %1696 = vmatprep.subr.bf16.mxu0 0
    %1697 = vmatpush1.bf16.msra.mxu0 %v1429
    %1698 = vmatprep.subr.bf16.mxu0 0
    %1699 = vmatpush1.bf16.msra.mxu0 %v1430
    %1700 = vmatprep.subr.bf16.mxu0 0
    %1701 = vmatpush1.bf16.msra.mxu0 %v1431
    %1702 = vmatprep.subr.bf16.mxu0 0
    %1703 = vmatpush1.bf16.msra.mxu0 %v1432
    %1704 = vmatprep.subr.bf16.mxu0 0
    %1705 = vmatpush1.bf16.msra.mxu0 %v1433
    %1706 = vmatprep.mubr.bf16.mxu0 %v747
    %1707 = vmatmul.mubr.bf16.gmra.mrb[0].mxu0 %v746
    %v1708 = vpop.f32.mrb[0].mxu0
    %v1709 = vadd.f32 %v1669, %v1708
    %v1710 = vpop.f32.mrb[0].mxu0
    %v1711 = vpop.f32.mrb[0].mxu0
    %v1712 = vpop.f32.mrb[0].mxu0
    %1713 = vdwg.mxu0
    %1714 = vmatprep.subr.bf16.mxu0 0
    %1715 = vmatpush1.bf16.msra.mxu0 %v1434
    %1716 = vmatprep.subr.bf16.mxu0 0
    %1717 = vmatpush1.bf16.msra.mxu0 %v1435
    %1718 = vmatprep.subr.bf16.mxu0 0
    %1719 = vmatpush1.bf16.msra.mxu0 %v1436
    %1720 = vmatprep.subr.bf16.mxu0 0
    %1721 = vmatpush1.bf16.msra.mxu0 %v1437
    %1722 = vmatprep.subr.bf16.mxu0 0
    %1723 = vmatpush1.bf16.msra.mxu0 %v1438
    %1724 = vmatprep.subr.bf16.mxu0 0
    %1725 = vmatpush1.bf16.msra.mxu0 %v1439
    %1726 = vmatprep.subr.bf16.mxu0 0
    %1727 = vmatpush1.bf16.msra.mxu0 %v1440
    %1728 = vmatprep.subr.bf16.mxu0 0
    %1729 = vmatpush1.bf16.msra.mxu0 %v1441
    %1730 = vmatprep.subr.bf16.mxu0 0
    %1731 = vmatpush1.bf16.msra.mxu0 %v1442
    %1732 = vmatprep.subr.bf16.mxu0 0
    %1733 = vmatpush1.bf16.msra.mxu0 %v1443
    %1734 = vmatprep.subr.bf16.mxu0 0
    %1735 = vmatpush1.bf16.msra.mxu0 %v1444
    %1736 = vmatprep.subr.bf16.mxu0 0
    %1737 = vmatpush1.bf16.msra.mxu0 %v1445
    %1738 = vmatprep.subr.bf16.mxu0 0
    %1739 = vmatpush1.bf16.msra.mxu0 %v1446
    %1740 = vmatprep.subr.bf16.mxu0 0
    %1741 = vmatpush1.bf16.msra.mxu0 %v1447
    %1742 = vmatprep.subr.bf16.mxu0 0
    %1743 = vmatpush1.bf16.msra.mxu0 %v1448
    %1744 = vmatprep.subr.bf16.mxu0 0
    %1745 = vmatpush1.bf16.msra.mxu0 %v1449
    %1746 = vmatprep.mubr.bf16.mxu0 %v749
    %1747 = vmatmul.mubr.bf16.gmra.mrb[0].mxu0 %v748
    %v1748 = vpop.f32.mrb[0].mxu0
    %v1749 = vadd.f32 %v1709, %v1748
    %v1750 = vpop.f32.mrb[0].mxu0
    %v1751 = vpop.f32.mrb[0].mxu0
    %v1752 = vpop.f32.mrb[0].mxu0
    %1753 = vdwg.mxu0
    %1754 = vmatprep.subr.bf16.mxu0 0
    %1755 = vmatpush1.bf16.msra.mxu0 %v1450
    %1756 = vmatprep.subr.bf16.mxu0 0
    %1757 = vmatpush1.bf16.msra.mxu0 %v1451
    %1758 = vmatprep.subr.bf16.mxu0 0
    %1759 = vmatpush1.bf16.msra.mxu0 %v1452
    %1760 = vmatprep.subr.bf16.mxu0 0
    %1761 = vmatpush1.bf16.msra.mxu0 %v1453
    %1762 = vmatprep.subr.bf16.mxu0 0
    %1763 = vmatpush1.bf16.msra.mxu0 %v1454
    %1764 = vmatprep.subr.bf16.mxu0 0
    %1765 = vmatpush1.bf16.msra.mxu0 %v1455
    %1766 = vmatprep.subr.bf16.mxu0 0
    %1767 = vmatpush1.bf16.msra.mxu0 %v1456
    %1768 = vmatprep.subr.bf16.mxu0 0
    %1769 = vmatpush1.bf16.msra.mxu0 %v1457
    %1770 = vmatprep.subr.bf16.mxu0 0
    %1771 = vmatpush1.bf16.msra.mxu0 %v1458
    %1772 = vmatprep.subr.bf16.mxu0 0
    %1773 = vmatpush1.bf16.msra.mxu0 %v1459
    %1774 = vmatprep.subr.bf16.mxu0 0
    %1775 = vmatpush1.bf16.msra.mxu0 %v1460
    %1776 = vmatprep.subr.bf16.mxu0 0
    %1777 = vmatpush1.bf16.msra.mxu0 %v1461
    %1778 = vmatprep.subr.bf16.mxu0 0
    %1779 = vmatpush1.bf16.msra.mxu0 %v1462
    %1780 = vmatprep.subr.bf16.mxu0 0
    %1781 = vmatpush1.bf16.msra.mxu0 %v1463
    %1782 = vmatprep.subr.bf16.mxu0 0
    %1783 = vmatpush1.bf16.msra.mxu0 %v1464
    %1784 = vmatprep.subr.bf16.mxu0 0
    %1785 = vmatpush1.bf16.msra.mxu0 %v1465
    %1786 = vmatprep.mubr.bf16.mxu0 %v751
    %1787 = vmatmul.mubr.bf16.gmra.mrb[0].mxu0 %v750
    %v1788 = vpop.f32.mrb[0].mxu0
    %v1789 = vadd.f32 %v1749, %v1788
    %v1790 = vpop.f32.mrb[0].mxu0
    %v1791 = vpop.f32.mrb[0].mxu0
    %v1792 = vpop.f32.mrb[0].mxu0
    %1793 = vdwg.mxu0
    %1794 = vmatprep.subr.bf16.mxu0 0
    %1795 = vmatpush1.bf16.msra.mxu0 %v1466
    %1796 = vmatprep.subr.bf16.mxu0 0
    %1797 = vmatpush1.bf16.msra.mxu0 %v1467
    %1798 = vmatprep.subr.bf16.mxu0 0
    %1799 = vmatpush1.bf16.msra.mxu0 %v1468
    %1800 = vmatprep.subr.bf16.mxu0 0
    %1801 = vmatpush1.bf16.msra.mxu0 %v1469
    %1802 = vmatprep.subr.bf16.mxu0 0
    %1803 = vmatpush1.bf16.msra.mxu0 %v1470
    %1804 = vmatprep.subr.bf16.mxu0 0
    %1805 = vmatpush1.bf16.msra.mxu0 %v1471
    %1806 = vmatprep.subr.bf16.mxu0 0
    %1807 = vmatpush1.bf16.msra.mxu0 %v1472
    %1808 = vmatprep.subr.bf16.mxu0 0
    %1809 = vmatpush1.bf16.msra.mxu0 %v1473
    %1810 = vmatprep.subr.bf16.mxu0 0
    %1811 = vmatpush1.bf16.msra.mxu0 %v1474
    %1812 = vmatprep.subr.bf16.mxu0 0
    %1813 = vmatpush1.bf16.msra.mxu0 %v1475
    %1814 = vmatprep.subr.bf16.mxu0 0
    %1815 = vmatpush1.bf16.msra.mxu0 %v1476
    %1816 = vmatprep.subr.bf16.mxu0 0
    %1817 = vmatpush1.bf16.msra.mxu0 %v1477
    %1818 = vmatprep.subr.bf16.mxu0 0
    %1819 = vmatpush1.bf16.msra.mxu0 %v1478
    %1820 = vmatprep.subr.bf16.mxu0 0
    %1821 = vmatpush1.bf16.msra.mxu0 %v1479
    %1822 = vmatprep.subr.bf16.mxu0 0
    %1823 = vmatpush1.bf16.msra.mxu0 %v1480
    %1824 = vmatprep.subr.bf16.mxu0 0
    %1825 = vmatpush1.bf16.msra.mxu0 %v1481
    %1826 = vmatprep.mubr.bf16.mxu0 %v753
    %1827 = vmatmul.mubr.bf16.gmra.mrb[0].mxu0 %v752
    %v1828 = vpop.f32.mrb[0].mxu0
    %v1829 = vadd.f32 %v1789, %v1828
    %v1830 = vpop.f32.mrb[0].mxu0
    %v1831 = vpop.f32.mrb[0].mxu0
    %v1832 = vpop.f32.mrb[0].mxu0
    %1833 = vdwg.mxu0
    %1834 = vmatprep.subr.bf16.mxu0 0
    %1835 = vmatpush1.bf16.msra.mxu0 %v1482
    %1836 = vmatprep.subr.bf16.mxu0 0
    %1837 = vmatpush1.bf16.msra.mxu0 %v1483
    %1838 = vmatprep.subr.bf16.mxu0 0
    %1839 = vmatpush1.bf16.msra.mxu0 %v1484
    %1840 = vmatprep.subr.bf16.mxu0 0
    %1841 = vmatpush1.bf16.msra.mxu0 %v1485
    %1842 = vmatprep.subr.bf16.mxu0 0
    %1843 = vmatpush1.bf16.msra.mxu0 %v1486
    %1844 = vmatprep.subr.bf16.mxu0 0
    %1845 = vmatpush1.bf16.msra.mxu0 %v1487
    %1846 = vmatprep.subr.bf16.mxu0 0
    %1847 = vmatpush1.bf16.msra.mxu0 %v1488
    %1848 = vmatprep.subr.bf16.mxu0 0
    %1849 = vmatpush1.bf16.msra.mxu0 %v1489
    %1850 = vmatprep.subr.bf16.mxu0 0
    %1851 = vmatpush1.bf16.msra.mxu0 0
    %1852 = vmatprep.subr.bf16.mxu0 0
    %1853 = vmatpush1.bf16.msra.mxu0 0
    %1854 = vmatprep.subr.bf16.mxu0 0
    %1855 = vmatpush1.bf16.msra.mxu0 0
    %1856 = vmatprep.subr.bf16.mxu0 0
    %1857 = vmatpush1.bf16.msra.mxu0 0
    %1858 = vmatprep.subr.bf16.mxu0 0
    %1859 = vmatpush1.bf16.msra.mxu0 0
    %1860 = vmatprep.subr.bf16.mxu0 0
    %1861 = vmatpush1.bf16.msra.mxu0 0
    %1862 = vmatprep.subr.bf16.mxu0 0
    %1863 = vmatpush1.bf16.msra.mxu0 0
    %1864 = vmatprep.subr.bf16.mxu0 0
    %1865 = vmatpush1.bf16.msra.mxu0 0
    %1866 = vmatprep.mubr.bf16.mxu0 0
    %1867 = vmatmul.mubr.bf16.gmra.mrb[0].mxu0 %v754
    %v1868 = vpop.f32.mrb[0].mxu0
    %v1869 = vadd.f32 %v1829, %v1868
    %v1870 = vpop.f32.mrb[0].mxu0
    %v1871 = vpop.f32.mrb[0].mxu0
    %v1872 = vpop.f32.mrb[0].mxu0
    %1873 = vdwg.mxu0
    %v1874 = vlaneseq
    %v1875 = vand.u32 %v1874, 127
    %vm1876 = vcmp.lt.s32.totalorder %v1875, 6
    %v1877 = vsel %vm1876, %v1869, -1e+30
    %1878 = vmax.xlane.f32.xlu0 %v1877
    %v1879 = vpop.xlane.xlu0 %1878
    %v1880 = vsub.f32 %v1869, %v1879
    %v1881 = vsel %vm1876, %v1880, 0.0
    %v1882 = vmul.f32 %v1881, 1.442695
    %v1883 = vpow.pop %v1882
    %v1884 = vsel %vm1876, %v1883, 0.0
    %1885 = vadd.xlane.f32.xlu0 %v1884
    %v1886 = vpop.xlane.xlu0 %1885
    %v1887 = vrcp.pop %v1886
    %v1888 = vmul.f32 %v1884, %v1887
    %v1889 = vmax.f32 %v1888, 0.0001
    %v1890 = vmin.f32 %v1889, 0.9999
    %v1891 = vtanh.pop %v1869
    %v1892 = vmul.f32 %v1891, 10.0
    %vm1893 = vcmp.eq.s32.totalorder %v1875, 6
    %v1894 = vsel %vm1893, %v1892, %v1869
    %v1895 = vsel %vm1876, %v1890, %v1894
    %1896 = vst [vmem:[%s5] sm:$0xff] %v1895
    // Predicated region
    $region30: #{actor_forward.1} parent=1 // pred_check
      _
    $region31: #{actor_forward.1} parent=1 // pred_check_branch
      %1898 = sbr.rel (0) target = $region33
    $region32: #{actor_forward.1} parent=1 // pred_region
      _
    $region33: #{actor_forward.1} parent=1 // pred_fallthru
      _
    // Predicated region
    $region34: #{actor_forward.1} parent=1 // pred_check
      _
    $region35: #{actor_forward.1} parent=1 // pred_check_branch
      %1900 = sbr.rel (0) target = $region37
    $region36: #{actor_forward.1} parent=1 // pred_region
      _
    $region37: #{actor_forward.1} parent=1 // pred_fallthru
      _
    %1901 = vsyncpa [#allocation3], 1
    %1902 = vsyncpa [#allocation5], 1

</llo_original>
